<compile_context>
chip_gen: v7x
topology: tpu7x:2x2x1
jax: 0.10.0
libtpu: 0.0.40
codegen_flags: <defaults>
</compile_context>

<pallas_src>
import jax
import jax.numpy as jnp
import numpy as np
from jax import lax
from jax.experimental import pallas as pl
from jax.experimental.pallas import tpu as pltpu

# ---------------- model configuration (matches HardwareVisionNN ctor) -------
BATCH = 2
NUM_PROP = 16
NUM_SCAN = 24
NUM_PRIV_EXPLICIT = 4
NUM_PRIV_LATENT = 8
NUM_HIST = 10                        # tsteps==10 StateHistoryEncoder variant
NUM_ACTIONS = 8
ACTOR_HIDDEN = (512, 256, 128)
SCAN_ENCODER_DIMS = (128, 64, 32)    # only last dim matters (depth_latent width)
PRIV_ENCODER_DIMS = (64, 20)         # -> history-encoder output dim = 20
ESTIMATOR_HIDDEN = (128, 64)
CHANNEL = 10                         # StateHistoryEncoder channel_size
TANH_OUT = False
NUM_OBS = NUM_PROP + NUM_SCAN + NUM_PRIV_EXPLICIT + NUM_PRIV_LATENT + NUM_HIST * NUM_PROP
HIST_START = NUM_PROP + NUM_SCAN + NUM_PRIV_EXPLICIT + NUM_PRIV_LATENT   # 52

# Conv1d configs for the tsteps==10 branch.
K1, S1 = 4, 2
K2, S2 = 2, 1
L1 = (NUM_HIST - K1) // S1 + 1       # 4
L2 = (L1 - K2) // S2 + 1             # 3
HIST_LATENT = PRIV_ENCODER_DIMS[-1]  # 20

C3 = 3 * CHANNEL                     # 30  projection width / conv1 in-ch
C2C = 2 * CHANNEL                    # 20  conv1 out-ch
PROJ_W = NUM_HIST * C3               # 300 time-major projection row (lanes)
C1_W = L1 * C2C                      # 80  conv1 output, (t, o) in lanes
C2_W = L2 * CHANNEL                  # 30  conv2 output, (t, c) in lanes
BACKBONE_IN = NUM_PROP + SCAN_ENCODER_DIMS[-1] + NUM_PRIV_EXPLICIT + HIST_LATENT  # 72
PD_W = NUM_PROP + SCAN_ENCODER_DIMS[-1]                                           # 48
X_W = PD_W + NUM_HIST * NUM_PROP                                                  # 208
OUT_PAD = 128                        # lane-dense output width

# -------- packed parameter layout (built ONCE by pack_params) ---------------
# All <=128-wide weights live in one lane-dense (W128_ROWS, 128) bf16 slab.
# Every block starts at a row offset that is a multiple of 16 (bf16 sublane tile).
OFF_WE0  = 0        # (16, 128)   estimator layer 0
OFF_WE1  = 16       # (128, 64)   estimator layer 1
OFF_WE2  = 144      # (64, 4)     estimator layer 2
OFF_WENC = 208      # (16, 30)    history per-timestep projection (dense now)
OFF_W1BD = 224      # (300, 80)   conv1 folded (block-structured, stride 2)
OFF_W2BD = 528      # (80, 30)    conv2 folded (block-structured, stride 1)
OFF_WOUT = 608      # (30, 20)    output linear, channel-major Flatten folded
OFF_WA3  = 640      # (128, 128)  backbone layer 3 (cols padded to 128 for dense out)
OFF_WA2  = 768      # (256, 128)  backbone layer 2
W128_ROWS = 1024

# All biases live in one (11, 512) f32 slab, one bias per row; conv biases are
# pre-tiled across output timesteps so every layer is a single row bias-add.
(BR_E0, BR_E1, BR_E2, BR_ENC, BR_C1, BR_C2, BR_OUT,
 BR_A0, BR_A1, BR_A2, BR_A3) = range(11)
BIAS_ROWS, BIAS_COLS = 11, 512


def _elu(x):
    # PyTorch nn.ELU(alpha=1.0), computed in f32.
    return jnp.where(x > 0, x, jnp.exp(jnp.minimum(x, 0.0)) - 1.0)


# ----------------------------- the fused kernel -----------------------------
def hardware_vision_kernel(x_ref, w128_ref, wa0_ref, wa1_ref, bias_ref, out_ref):
    f32, bf16 = jnp.float32, jnp.bfloat16
    x = x_ref[...]                       # (TB, 208) f32  [prop(16)|depth(32)|hist(160)]
    TB = x.shape[0]                      # static block batch size

    def mm(a, off, rows, cols):          # bf16 x bf16 -> f32-accumulate on the MXU
        return jnp.dot(a.astype(bf16), w128_ref[off:off + rows, :cols],
                       preferred_element_type=f32)

    def bias(row, width):                # f32 bias row, broadcasts over batch
        return bias_ref[row:row + 1, :width]

    prop = x[:, :NUM_PROP]

    # ---- Estimator MLP: prop -> 128 -> 64 -> num_priv_explicit -------------
    e = _elu(mm(prop, OFF_WE0, NUM_PROP, ESTIMATOR_HIDDEN[0]) + bias(BR_E0, ESTIMATOR_HIDDEN[0]))
    e = _elu(mm(e, OFF_WE1, ESTIMATOR_HIDDEN[0], ESTIMATOR_HIDDEN[1]) + bias(BR_E1, ESTIMATOR_HIDDEN[1]))
    est = mm(e, OFF_WE2, ESTIMATOR_HIDDEN[1], NUM_PRIV_EXPLICIT) + bias(BR_E2, NUM_PRIV_EXPLICIT)

    # ---- StateHistoryEncoder: dense projection + folded convs (4 matmuls) ---
    # hist lanes -> (NUM_HIST*TB, 16) rows, (t, b) ordered (static slices + sublane concat)
    hist_rows = jnp.concatenate(
        [x[:, PD_W + NUM_PROP * t: PD_W + NUM_PROP * (t + 1)] for t in range(NUM_HIST)],
        axis=0)                                                             # (10*TB, 16)
    proj_rows = _elu(mm(hist_rows, OFF_WENC, NUM_PROP, C3) + bias(BR_ENC, C3))  # (10*TB, 30)
    # lane relayout: timestep t goes to lanes [30t:30t+30]  -> (TB, 300)
    proj = jnp.concatenate(
        [proj_rows[t * TB:(t + 1) * TB, :] for t in range(NUM_HIST)], axis=1)
    # Conv1d(3C->2C, k=4, s=2) folded into one block-structured matrix
    c1 = _elu(mm(proj, OFF_W1BD, PROJ_W, C1_W) + bias(BR_C1, C1_W))         # (TB, 80)
    # Conv1d(2C->C, k=2, s=1) folded
    c2 = _elu(mm(c1, OFF_W2BD, C1_W, C2_W) + bias(BR_C2, C2_W))             # (TB, 30)
    # output Linear with channel-major nn.Flatten folded into a row permute
    hist_latent = _elu(mm(c2, OFF_WOUT, C2_W, HIST_LATENT) + bias(BR_OUT, HIST_LATENT))  # (TB, 20)

    # ---- actor_backbone0 ----------------------------------------------------
    a = jnp.concatenate([x[:, :PD_W], est, hist_latent], axis=1)            # (TB, 72)
    a = _elu(jnp.dot(a.astype(bf16), wa0_ref[...], preferred_element_type=f32)
             + bias(BR_A0, ACTOR_HIDDEN[0]))
    a = _elu(jnp.dot(a.astype(bf16), wa1_ref[...], preferred_element_type=f32)
             + bias(BR_A1, ACTOR_HIDDEN[1]))
    a = _elu(mm(a, OFF_WA2, ACTOR_HIDDEN[1], ACTOR_HIDDEN[2]) + bias(BR_A2, ACTOR_HIDDEN[2]))
    a = mm(a, OFF_WA3, ACTOR_HIDDEN[2], OUT_PAD) + bias(BR_A3, OUT_PAD)     # (TB, 128) dense
    if TANH_OUT:
        a = jnp.tanh(a)
    out_ref[...] = a


# --------------------------- parameter handling -----------------------------
def init_params(key):
    """PyTorch-default-style init.  Weights are rounded through bf16 once here
    (they are stored/shipped to the kernel in bf16), biases stay f32."""
    def _q(x):  # bf16-representable weight values
        return x.astype(jnp.bfloat16).astype(jnp.float32)

    def linear(k, fan_in, fan_out):
        k1, k2 = jax.random.split(k)
        bound = 1.0 / np.sqrt(fan_in)
        w_ = _q(jax.random.uniform(k1, (fan_in, fan_out), jnp.float32, -bound, bound))
        b_ = jax.random.uniform(k2, (1, fan_out), jnp.float32, -bound, bound)
        return w_, b_

    keys = jax.random.split(key, 12)
    P = {}
    # Estimator
    P['we0'], P['be0'] = linear(keys[0], NUM_PROP, ESTIMATOR_HIDDEN[0])
    P['we1'], P['be1'] = linear(keys[1], ESTIMATOR_HIDDEN[0], ESTIMATOR_HIDDEN[1])
    P['we2'], P['be2'] = linear(keys[2], ESTIMATOR_HIDDEN[1], NUM_PRIV_EXPLICIT)
    # StateHistoryEncoder projection
    P['wenc'], P['benc'] = linear(keys[3], NUM_PROP, C3)
    # Conv weights kept in PyTorch OIW layout as canonical parameters
    kk = jax.random.split(keys[4], 4)
    bd1 = 1.0 / np.sqrt(C3 * K1)
    P['w1_oiw'] = _q(jax.random.uniform(kk[0], (C2C, C3, K1), jnp.float32, -bd1, bd1))
    P['b1'] = jax.random.uniform(kk[1], (1, C2C), jnp.float32, -bd1, bd1)
    bd2 = 1.0 / np.sqrt(C2C * K2)
    P['w2_oiw'] = _q(jax.random.uniform(kk[2], (CHANNEL, C2C, K2), jnp.float32, -bd2, bd2))
    P['b2'] = jax.random.uniform(kk[3], (1, CHANNEL), jnp.float32, -bd2, bd2)
    P['wout'], P['bout'] = linear(keys[5], CHANNEL * L2, HIST_LATENT)
    # actor_backbone0
    P['wa0'], P['ba0'] = linear(keys[6], BACKBONE_IN, ACTOR_HIDDEN[0])
    P['wa1'], P['ba1'] = linear(keys[7], ACTOR_HIDDEN[0], ACTOR_HIDDEN[1])
    P['wa2'], P['ba2'] = linear(keys[8], ACTOR_HIDDEN[1], ACTOR_HIDDEN[2])
    P['wa3'], P['ba3'] = linear(keys[9], ACTOR_HIDDEN[2], NUM_ACTIONS)
    return P


def pack_params(P):
    """ONE-TIME packing: fold conv/flatten structure into block-structured
    matrices and coalesce everything into bf16 weight slabs + one f32 bias
    slab.  Nothing here runs per forward call."""
    w128 = np.zeros((W128_ROWS, 128), np.float32)
    w128[OFF_WE0:OFF_WE0 + NUM_PROP, :ESTIMATOR_HIDDEN[0]] = np.asarray(P['we0'])
    w128[OFF_WE1:OFF_WE1 + ESTIMATOR_HIDDEN[0], :ESTIMATOR_HIDDEN[1]] = np.asarray(P['we1'])
    w128[OFF_WE2:OFF_WE2 + ESTIMATOR_HIDDEN[1], :NUM_PRIV_EXPLICIT] = np.asarray(P['we2'])

    # Dense per-timestep projection Linear(16 -> 30)
    w128[OFF_WENC:OFF_WENC + NUM_PROP, :C3] = np.asarray(P['wenc'])

    # Conv1d(3C->2C, k=4, s=2) as one (300, 80) block-structured matrix:
    # rows = (input timestep, in-ch), cols = (output timestep, out-ch).
    w1_oiw = np.asarray(P['w1_oiw'])                      # (2C, 3C, K1)
    w1_bd = np.zeros((PROJ_W, C1_W), np.float32)
    for t in range(L1):
        for k in range(K1):
            r = (t * S1 + k) * C3
            w1_bd[r:r + C3, t * C2C:(t + 1) * C2C] = w1_oiw[:, :, k].T
    w128[OFF_W1BD:OFF_W1BD + PROJ_W, :C1_W] = w1_bd

    # Conv1d(2C->C, k=2, s=1) as one (80, 30) block-structured matrix.
    w2_oiw = np.asarray(P['w2_oiw'])                      # (C, 2C, K2)
    w2_bd = np.zeros((C1_W, C2_W), np.float32)
    for t in range(L2):
        for k in range(K2):
            r = (t * S2 + k) * C2C
            w2_bd[r:r + C2C, t * CHANNEL:(t + 1) * CHANNEL] = w2_oiw[:, :, k].T
    w128[OFF_W2BD:OFF_W2BD + C1_W, :C2_W] = w2_bd

    # Output linear with the channel-major nn.Flatten folded into a row permute:
    # kernel's c2 columns are (t, c) while PyTorch flatten rows are (c, t).
    wout_t = (np.asarray(P['wout'])
              .reshape(CHANNEL, L2, HIST_LATENT)
              .transpose(1, 0, 2)
              .reshape(L2 * CHANNEL, HIST_LATENT))
    w128[OFF_WOUT:OFF_WOUT + L2 * CHANNEL, :HIST_LATENT] = wout_t

    # wa3 placed at 128 lane-width (cols 8..127 stay zero -> dense output store)
    w128[OFF_WA3:OFF_WA3 + ACTOR_HIDDEN[2], :NUM_ACTIONS] = np.asarray(P['wa3'])
    w128[OFF_WA2:OFF_WA2 + ACTOR_HIDDEN[1], :ACTOR_HIDDEN[2]] = np.asarray(P['wa2'])

    biases = np.zeros((BIAS_ROWS, BIAS_COLS), np.float32)
    biases[BR_E0, :ESTIMATOR_HIDDEN[0]] = np.asarray(P['be0'])[0]
    biases[BR_E1, :ESTIMATOR_HIDDEN[1]] = np.asarray(P['be1'])[0]
    biases[BR_E2, :NUM_PRIV_EXPLICIT] = np.asarray(P['be2'])[0]
    biases[BR_ENC, :C3] = np.asarray(P['benc'])[0]
    biases[BR_C1, :C1_W] = np.tile(np.asarray(P['b1'])[0], L1)
    biases[BR_C2, :C2_W] = np.tile(np.asarray(P['b2'])[0], L2)
    biases[BR_OUT, :HIST_LATENT] = np.asarray(P['bout'])[0]
    biases[BR_A0, :ACTOR_HIDDEN[0]] = np.asarray(P['ba0'])[0]
    biases[BR_A1, :ACTOR_HIDDEN[1]] = np.asarray(P['ba1'])[0]
    biases[BR_A2, :ACTOR_HIDDEN[2]] = np.asarray(P['ba2'])[0]
    biases[BR_A3, :NUM_ACTIONS] = np.asarray(P['ba3'])[0]

    return dict(
        w128=jnp.asarray(w128, jnp.bfloat16),                    # (1024, 128) bf16
        wa0=jnp.asarray(np.asarray(P['wa0']), jnp.bfloat16),     # (72, 512)   bf16
        wa1=jnp.asarray(np.asarray(P['wa1']), jnp.bfloat16),     # (512, 256)  bf16
        biases=jnp.asarray(biases, jnp.float32),                 # (11, 512)   f32
    )


def _cost_estimate(b_pad):
    kn = (NUM_PROP * ESTIMATOR_HIDDEN[0] + ESTIMATOR_HIDDEN[0] * ESTIMATOR_HIDDEN[1]
          + ESTIMATOR_HIDDEN[1] * NUM_PRIV_EXPLICIT
          + NUM_HIST * NUM_PROP * C3
          + PROJ_W * C1_W + C1_W * C2_W + C2_W * HIST_LATENT
          + BACKBONE_IN * ACTOR_HIDDEN[0] + ACTOR_HIDDEN[0] * ACTOR_HIDDEN[1]
          + ACTOR_HIDDEN[1] * ACTOR_HIDDEN[2] + ACTOR_HIDDEN[2] * OUT_PAD)
    elu_elems = (ESTIMATOR_HIDDEN[0] + ESTIMATOR_HIDDEN[1] + NUM_HIST * C3 + C1_W
                 + C2_W + HIST_LATENT + ACTOR_HIDDEN[0] + ACTOR_HIDDEN[1] + ACTOR_HIDDEN[2])
    weight_bytes = (W128_ROWS * 128 + BACKBONE_IN * ACTOR_HIDDEN[0]
                    + ACTOR_HIDDEN[0] * ACTOR_HIDDEN[1]) * 2 + BIAS_ROWS * BIAS_COLS * 4
    act_bytes = b_pad * (X_W + OUT_PAD) * 4
    return pl.CostEstimate(flops=2 * b_pad * kn, transcendentals=b_pad * elu_elems,
                           bytes_accessed=weight_bytes + act_bytes)


# ------------------------------ forward wrapper ------------------------------
@jax.jit
def hardware_vision_forward(obs, depth_latent, packed):
    B = obs.shape[0]
    # Sublane-full batch; chunk large batches over a 1-D grid.  Weight
    # BlockSpecs use a constant index_map so the ~0.6 MB of weights is DMA'd
    # once per call and stays VMEM-resident across grid steps.
    b_pad = max(8, -(-B // 8) * 8)
    if b_pad <= 256:
        tb = b_pad
    else:
        tb = 256
        b_pad = -(-B // tb) * tb
    n_chunks = b_pad // tb

    # ONE coalesced, lane-contiguous activation input: [prop(16)|depth(32)|hist(160)]
    x = jnp.concatenate([obs[:, :NUM_PROP], depth_latent, obs[:, HIST_START:NUM_OBS]],
                        axis=1)
    if b_pad != B:
        x = jnp.pad(x, ((0, b_pad - B), (0, 0)))

    w128, wa0, wa1, biases = packed['w128'], packed['wa0'], packed['wa1'], packed['biases']

    sem = ("parallel",) if n_chunks > 1 else ("arbitrary",)
    out = pl.pallas_call(
        hardware_vision_kernel,
        out_shape=jax.ShapeDtypeStruct((b_pad, OUT_PAD), jnp.float32),
        grid=(n_chunks,),
        in_specs=[
            pl.BlockSpec((tb, X_W), lambda i: (i, 0)),          # activations (chunked)
            pl.BlockSpec(w128.shape, lambda i: (0, 0)),         # weights: constant block
            pl.BlockSpec(wa0.shape, lambda i: (0, 0)),
            pl.BlockSpec(wa1.shape, lambda i: (0, 0)),
            pl.BlockSpec(biases.shape, lambda i: (0, 0)),
        ],
        out_specs=pl.BlockSpec((tb, OUT_PAD), lambda i: (i, 0)),
        compiler_params=pltpu.CompilerParams(dimension_semantics=sem),
        cost_estimate=_cost_estimate(b_pad),
    )(x, w128, wa0, wa1, biases)
    return out[:B, :NUM_ACTIONS]


# ---------------------------- pure-JAX reference -----------------------------
def reference_forward(obs, depth_latent, P):
    """Mirrors the PyTorch graph exactly (NCW convs + Flatten + concat)."""
    B = obs.shape[0]
    hi = lax.Precision.HIGHEST
    mm = lambda a, b: jnp.dot(a, b, precision=hi)
    elu = _elu
    prop = obs[:, :NUM_PROP]
    # Estimator (its value overwrites obs priv_explicit slice in PyTorch; only
    # the value matters downstream).
    e = elu(mm(prop, P['we0']) + P['be0'])
    e = elu(mm(e, P['we1']) + P['be1'])
    est = mm(e, P['we2']) + P['be2']
    # StateHistoryEncoder, PyTorch style
    hist = obs[:, -NUM_HIST * NUM_PROP:].reshape(B * NUM_HIST, NUM_PROP)
    proj = elu(mm(hist, P['wenc']) + P['benc'])
    x = proj.reshape(B, NUM_HIST, C3).transpose(0, 2, 1)            # NCW
    dn = ('NCH', 'OIH', 'NCH')
    y = lax.conv_general_dilated(x, P['w1_oiw'], (S1,), 'VALID',
                                 dimension_numbers=dn, precision=hi)
    y = elu(y + P['b1'].reshape(1, -1, 1))
    y = lax.conv_general_dilated(y, P['w2_oiw'], (S2,), 'VALID',
                                 dimension_numbers=dn, precision=hi)
    y = elu(y + P['b2'].reshape(1, -1, 1))
    flat = y.reshape(B, -1)                                         # nn.Flatten
    hist_latent = elu(mm(flat, P['wout']) + P['bout'])
    # actor backbone
    backbone_in = jnp.concatenate([prop, depth_latent, est, hist_latent], axis=1)
    a = elu(mm(backbone_in, P['wa0']) + P['ba0'])
    a = elu(mm(a, P['wa1']) + P['ba1'])
    a = elu(mm(a, P['wa2']) + P['ba2'])
    a = mm(a, P['wa3']) + P['ba3']
    if TANH_OUT:
        a = jnp.tanh(a)
    return a


if __name__ == "__main__":
    key = jax.random.PRNGKey(0)
    kp, ko, kd = jax.random.split(key, 3)
    P = init_params(kp)
    packed = pack_params(P)          # one-time weight packing (bf16 slabs)

    obs = jax.random.normal(ko, (BATCH, NUM_OBS), jnp.float32)
    depth_latent = jax.random.normal(kd, (BATCH, SCAN_ENCODER_DIMS[-1]), jnp.float32)

    out = hardware_vision_forward(obs, depth_latent, packed)
    jax.block_until_ready(out)

    ref = reference_forward(obs, depth_latent, P)
    assert out.shape == (BATCH, NUM_ACTIONS)
    if not np.allclose(np.asarray(out), np.asarray(ref), rtol=1e-2, atol=1e-2):
        diff = float(np.max(np.abs(np.asarray(out) - np.asarray(ref))))
        raise AssertionError(f"kernel/reference mismatch, max abs diff = {diff}")
    print("KERNEL_OK")
</pallas_src>

<mosaic_0001>
module attributes {stable_mosaic.version = 11 : i64} {
  func.func @hardware_vision_kernel(%arg0: i32, %arg1: memref<8x208xf32, #tpu.memory_space<vmem>>, %arg2: memref<1024x128xbf16, #tpu.memory_space<vmem>>, %arg3: memref<72x512xbf16, #tpu.memory_space<vmem>>, %arg4: memref<512x256xbf16, #tpu.memory_space<vmem>>, %arg5: memref<11x512xf32, #tpu.memory_space<vmem>>, %arg6: memref<8x128xf32, #tpu.memory_space<vmem>>) attributes {dimension_semantics = [#tpu.dimension_semantics<arbitrary>], iteration_bounds = array<i64: 1>, scalar_prefetch = 0 : i64, scratch_operands = 0 : i64, tpu.core_type = #tpu.core_type<tc>, window_params = [{transform_indices = @transform_0, window_bounds = array<i64: 8, 208>}, {pipeline_mode = #tpu.pipeline_mode<synchronous>, transform_indices = @transform_1, window_bounds = array<i64: 1024, 128>}, {pipeline_mode = #tpu.pipeline_mode<synchronous>, transform_indices = @transform_2, window_bounds = array<i64: 72, 512>}, {pipeline_mode = #tpu.pipeline_mode<synchronous>, transform_indices = @transform_3, window_bounds = array<i64: 512, 256>}, {pipeline_mode = #tpu.pipeline_mode<synchronous>, transform_indices = @transform_4, window_bounds = array<i64: 11, 512>}, {transform_indices = @transform_5, window_bounds = array<i64: 8, 128>}]} {
    %c0 = arith.constant 0 : index
    %c0_0 = arith.constant 0 : index
    %0 = vector.load %arg1[%c0, %c0_0] : memref<8x208xf32, #tpu.memory_space<vmem>>, vector<8x208xf32>
    %1 = vector.extract_strided_slice %0 {offsets = [0, 0], sizes = [8, 16], strides = [1, 1]} : vector<8x208xf32> to vector<8x16xf32>
    %2 = arith.truncf %1 : vector<8x16xf32> to vector<8x16xbf16>
    %c0_1 = arith.constant 0 : index
    %c0_2 = arith.constant 0 : index
    %3 = vector.load %arg2[%c0_1, %c0_2] : memref<1024x128xbf16, #tpu.memory_space<vmem>>, vector<16x128xbf16>
    %cst = arith.constant dense<0.000000e+00> : vector<8x128xf32>
    %4 = tpu.matmul %2, %3, %cst {dimension_numbers = #tpu.dot_dimension_numbers<[1], [0], [0], [1], [0, 0, 1, 1], [], []>} : vector<8x16xbf16>, vector<16x128xbf16>, vector<8x128xf32> -> vector<8x128xf32>
    %c0_3 = arith.constant 0 : index
    %c0_4 = arith.constant 0 : index
    %5 = vector.load %arg5[%c0_3, %c0_4] : memref<11x512xf32, #tpu.memory_space<vmem>>, vector<1x128xf32>
    %6 = vector.broadcast %5 : vector<1x128xf32> to vector<8x128xf32>
    %7 = arith.addf %4, %6 : vector<8x128xf32>
    %cst_5 = arith.constant 0.000000e+00 : f32
    %8 = vector.broadcast %cst_5 : f32 to vector<8x128xf32>
    %9 = arith.cmpf ogt, %7, %8 : vector<8x128xf32>
    %cst_6 = arith.constant 0.000000e+00 : f32
    %10 = vector.broadcast %cst_6 : f32 to vector<8x128xf32>
    %11 = arith.minimumf %7, %10 : vector<8x128xf32>
    %12 = math.exp %11 : vector<8x128xf32>
    %cst_7 = arith.constant 1.000000e+00 : f32
    %13 = vector.broadcast %cst_7 : f32 to vector<8x128xf32>
    %14 = arith.subf %12, %13 : vector<8x128xf32>
    %15 = arith.select %9, %7, %14 : vector<8x128xi1>, vector<8x128xf32>
    %16 = arith.truncf %15 : vector<8x128xf32> to vector<8x128xbf16>
    %c16 = arith.constant 16 : index
    %c0_8 = arith.constant 0 : index
    %17 = vector.load %arg2[%c16, %c0_8] : memref<1024x128xbf16, #tpu.memory_space<vmem>>, vector<128x64xbf16>
    %cst_9 = arith.constant dense<0.000000e+00> : vector<8x64xf32>
    %18 = tpu.matmul %16, %17, %cst_9 {dimension_numbers = #tpu.dot_dimension_numbers<[1], [0], [0], [1], [0, 0, 1, 1], [], []>} : vector<8x128xbf16>, vector<128x64xbf16>, vector<8x64xf32> -> vector<8x64xf32>
    %c1 = arith.constant 1 : index
    %c0_10 = arith.constant 0 : index
    %19 = vector.load %arg5[%c1, %c0_10] : memref<11x512xf32, #tpu.memory_space<vmem>>, vector<1x64xf32>
    %20 = vector.broadcast %19 : vector<1x64xf32> to vector<8x64xf32>
    %21 = arith.addf %18, %20 : vector<8x64xf32>
    %cst_11 = arith.constant 0.000000e+00 : f32
    %22 = vector.broadcast %cst_11 : f32 to vector<8x64xf32>
    %23 = arith.cmpf ogt, %21, %22 : vector<8x64xf32>
    %cst_12 = arith.constant 0.000000e+00 : f32
    %24 = vector.broadcast %cst_12 : f32 to vector<8x64xf32>
    %25 = arith.minimumf %21, %24 : vector<8x64xf32>
    %26 = math.exp %25 : vector<8x64xf32>
    %cst_13 = arith.constant 1.000000e+00 : f32
    %27 = vector.broadcast %cst_13 : f32 to vector<8x64xf32>
    %28 = arith.subf %26, %27 : vector<8x64xf32>
    %29 = arith.select %23, %21, %28 : vector<8x64xi1>, vector<8x64xf32>
    %30 = arith.truncf %29 : vector<8x64xf32> to vector<8x64xbf16>
    %c144 = arith.constant 144 : index
    %c0_14 = arith.constant 0 : index
    %31 = vector.load %arg2[%c144, %c0_14] : memref<1024x128xbf16, #tpu.memory_space<vmem>>, vector<64x4xbf16>
    %cst_15 = arith.constant dense<0.000000e+00> : vector<8x4xf32>
    %32 = tpu.matmul %30, %31, %cst_15 {dimension_numbers = #tpu.dot_dimension_numbers<[1], [0], [0], [1], [0, 0, 1, 1], [], []>} : vector<8x64xbf16>, vector<64x4xbf16>, vector<8x4xf32> -> vector<8x4xf32>
    %c2 = arith.constant 2 : index
    %c0_16 = arith.constant 0 : index
    %33 = vector.load %arg5[%c2, %c0_16] : memref<11x512xf32, #tpu.memory_space<vmem>>, vector<1x4xf32>
    %34 = vector.broadcast %33 : vector<1x4xf32> to vector<8x4xf32>
    %35 = arith.addf %32, %34 : vector<8x4xf32>
    %36 = vector.extract_strided_slice %0 {offsets = [0, 48], sizes = [8, 16], strides = [1, 1]} : vector<8x208xf32> to vector<8x16xf32>
    %37 = vector.extract_strided_slice %0 {offsets = [0, 64], sizes = [8, 16], strides = [1, 1]} : vector<8x208xf32> to vector<8x16xf32>
    %38 = vector.extract_strided_slice %0 {offsets = [0, 80], sizes = [8, 16], strides = [1, 1]} : vector<8x208xf32> to vector<8x16xf32>
    %39 = vector.extract_strided_slice %0 {offsets = [0, 96], sizes = [8, 16], strides = [1, 1]} : vector<8x208xf32> to vector<8x16xf32>
    %40 = vector.extract_strided_slice %0 {offsets = [0, 112], sizes = [8, 16], strides = [1, 1]} : vector<8x208xf32> to vector<8x16xf32>
    %41 = vector.extract_strided_slice %0 {offsets = [0, 128], sizes = [8, 16], strides = [1, 1]} : vector<8x208xf32> to vector<8x16xf32>
    %42 = vector.extract_strided_slice %0 {offsets = [0, 144], sizes = [8, 16], strides = [1, 1]} : vector<8x208xf32> to vector<8x16xf32>
    %43 = vector.extract_strided_slice %0 {offsets = [0, 160], sizes = [8, 16], strides = [1, 1]} : vector<8x208xf32> to vector<8x16xf32>
    %44 = vector.extract_strided_slice %0 {offsets = [0, 176], sizes = [8, 16], strides = [1, 1]} : vector<8x208xf32> to vector<8x16xf32>
    %45 = vector.extract_strided_slice %0 {offsets = [0, 192], sizes = [8, 16], strides = [1, 1]} : vector<8x208xf32> to vector<8x16xf32>
    %46 = tpu.concatenate %36, %37, %38, %39, %40, %41, %42, %43, %44, %45 in 0 : vector<8x16xf32>, vector<8x16xf32>, vector<8x16xf32>, vector<8x16xf32>, vector<8x16xf32>, vector<8x16xf32>, vector<8x16xf32>, vector<8x16xf32>, vector<8x16xf32>, vector<8x16xf32> -> vector<80x16xf32>
    %47 = arith.truncf %46 : vector<80x16xf32> to vector<80x16xbf16>
    %c208 = arith.constant 208 : index
    %c0_17 = arith.constant 0 : index
    %48 = vector.load %arg2[%c208, %c0_17] : memref<1024x128xbf16, #tpu.memory_space<vmem>>, vector<16x30xbf16>
    %cst_18 = arith.constant dense<0.000000e+00> : vector<80x30xf32>
    %49 = tpu.matmul %47, %48, %cst_18 {dimension_numbers = #tpu.dot_dimension_numbers<[1], [0], [0], [1], [0, 0, 1, 1], [], []>} : vector<80x16xbf16>, vector<16x30xbf16>, vector<80x30xf32> -> vector<80x30xf32>
    %c3 = arith.constant 3 : index
    %c0_19 = arith.constant 0 : index
    %50 = vector.load %arg5[%c3, %c0_19] : memref<11x512xf32, #tpu.memory_space<vmem>>, vector<1x30xf32>
    %51 = vector.broadcast %50 : vector<1x30xf32> to vector<80x30xf32>
    %52 = arith.addf %49, %51 : vector<80x30xf32>
    %cst_20 = arith.constant 0.000000e+00 : f32
    %53 = vector.broadcast %cst_20 : f32 to vector<80x30xf32>
    %54 = arith.cmpf ogt, %52, %53 : vector<80x30xf32>
    %cst_21 = arith.constant 0.000000e+00 : f32
    %55 = vector.broadcast %cst_21 : f32 to vector<80x30xf32>
    %56 = arith.minimumf %52, %55 : vector<80x30xf32>
    %57 = math.exp %56 : vector<80x30xf32>
    %cst_22 = arith.constant 1.000000e+00 : f32
    %58 = vector.broadcast %cst_22 : f32 to vector<80x30xf32>
    %59 = arith.subf %57, %58 : vector<80x30xf32>
    %60 = arith.select %54, %52, %59 : vector<80x30xi1>, vector<80x30xf32>
    %61 = vector.extract_strided_slice %60 {offsets = [0, 0], sizes = [8, 30], strides = [1, 1]} : vector<80x30xf32> to vector<8x30xf32>
    %62 = vector.extract_strided_slice %60 {offsets = [8, 0], sizes = [8, 30], strides = [1, 1]} : vector<80x30xf32> to vector<8x30xf32>
    %63 = vector.extract_strided_slice %60 {offsets = [16, 0], sizes = [8, 30], strides = [1, 1]} : vector<80x30xf32> to vector<8x30xf32>
    %64 = vector.extract_strided_slice %60 {offsets = [24, 0], sizes = [8, 30], strides = [1, 1]} : vector<80x30xf32> to vector<8x30xf32>
    %65 = vector.extract_strided_slice %60 {offsets = [32, 0], sizes = [8, 30], strides = [1, 1]} : vector<80x30xf32> to vector<8x30xf32>
    %66 = vector.extract_strided_slice %60 {offsets = [40, 0], sizes = [8, 30], strides = [1, 1]} : vector<80x30xf32> to vector<8x30xf32>
    %67 = vector.extract_strided_slice %60 {offsets = [48, 0], sizes = [8, 30], strides = [1, 1]} : vector<80x30xf32> to vector<8x30xf32>
    %68 = vector.extract_strided_slice %60 {offsets = [56, 0], sizes = [8, 30], strides = [1, 1]} : vector<80x30xf32> to vector<8x30xf32>
    %69 = vector.extract_strided_slice %60 {offsets = [64, 0], sizes = [8, 30], strides = [1, 1]} : vector<80x30xf32> to vector<8x30xf32>
    %70 = vector.extract_strided_slice %60 {offsets = [72, 0], sizes = [8, 30], strides = [1, 1]} : vector<80x30xf32> to vector<8x30xf32>
    %71 = tpu.concatenate %61, %62, %63, %64, %65, %66, %67, %68, %69, %70 in 1 : vector<8x30xf32>, vector<8x30xf32>, vector<8x30xf32>, vector<8x30xf32>, vector<8x30xf32>, vector<8x30xf32>, vector<8x30xf32>, vector<8x30xf32>, vector<8x30xf32>, vector<8x30xf32> -> vector<8x300xf32>
    %72 = arith.truncf %71 : vector<8x300xf32> to vector<8x300xbf16>
    %c224 = arith.constant 224 : index
    %c0_23 = arith.constant 0 : index
    %73 = vector.load %arg2[%c224, %c0_23] : memref<1024x128xbf16, #tpu.memory_space<vmem>>, vector<300x80xbf16>
    %cst_24 = arith.constant dense<0.000000e+00> : vector<8x80xf32>
    %74 = tpu.matmul %72, %73, %cst_24 {dimension_numbers = #tpu.dot_dimension_numbers<[1], [0], [0], [1], [0, 0, 1, 1], [], []>} : vector<8x300xbf16>, vector<300x80xbf16>, vector<8x80xf32> -> vector<8x80xf32>
    %c4 = arith.constant 4 : index
    %c0_25 = arith.constant 0 : index
    %75 = vector.load %arg5[%c4, %c0_25] : memref<11x512xf32, #tpu.memory_space<vmem>>, vector<1x80xf32>
    %76 = vector.broadcast %75 : vector<1x80xf32> to vector<8x80xf32>
    %77 = arith.addf %74, %76 : vector<8x80xf32>
    %cst_26 = arith.constant 0.000000e+00 : f32
    %78 = vector.broadcast %cst_26 : f32 to vector<8x80xf32>
    %79 = arith.cmpf ogt, %77, %78 : vector<8x80xf32>
    %cst_27 = arith.constant 0.000000e+00 : f32
    %80 = vector.broadcast %cst_27 : f32 to vector<8x80xf32>
    %81 = arith.minimumf %77, %80 : vector<8x80xf32>
    %82 = math.exp %81 : vector<8x80xf32>
    %cst_28 = arith.constant 1.000000e+00 : f32
    %83 = vector.broadcast %cst_28 : f32 to vector<8x80xf32>
    %84 = arith.subf %82, %83 : vector<8x80xf32>
    %85 = arith.select %79, %77, %84 : vector<8x80xi1>, vector<8x80xf32>
    %86 = arith.truncf %85 : vector<8x80xf32> to vector<8x80xbf16>
    %c528 = arith.constant 528 : index
    %c0_29 = arith.constant 0 : index
    %87 = vector.load %arg2[%c528, %c0_29] : memref<1024x128xbf16, #tpu.memory_space<vmem>>, vector<80x30xbf16>
    %cst_30 = arith.constant dense<0.000000e+00> : vector<8x30xf32>
    %88 = tpu.matmul %86, %87, %cst_30 {dimension_numbers = #tpu.dot_dimension_numbers<[1], [0], [0], [1], [0, 0, 1, 1], [], []>} : vector<8x80xbf16>, vector<80x30xbf16>, vector<8x30xf32> -> vector<8x30xf32>
    %c5 = arith.constant 5 : index
    %c0_31 = arith.constant 0 : index
    %89 = vector.load %arg5[%c5, %c0_31] : memref<11x512xf32, #tpu.memory_space<vmem>>, vector<1x30xf32>
    %90 = vector.broadcast %89 : vector<1x30xf32> to vector<8x30xf32>
    %91 = arith.addf %88, %90 : vector<8x30xf32>
    %cst_32 = arith.constant 0.000000e+00 : f32
    %92 = vector.broadcast %cst_32 : f32 to vector<8x30xf32>
    %93 = arith.cmpf ogt, %91, %92 : vector<8x30xf32>
    %cst_33 = arith.constant 0.000000e+00 : f32
    %94 = vector.broadcast %cst_33 : f32 to vector<8x30xf32>
    %95 = arith.minimumf %91, %94 : vector<8x30xf32>
    %96 = math.exp %95 : vector<8x30xf32>
    %cst_34 = arith.constant 1.000000e+00 : f32
    %97 = vector.broadcast %cst_34 : f32 to vector<8x30xf32>
    %98 = arith.subf %96, %97 : vector<8x30xf32>
    %99 = arith.select %93, %91, %98 : vector<8x30xi1>, vector<8x30xf32>
    %100 = arith.truncf %99 : vector<8x30xf32> to vector<8x30xbf16>
    %c608 = arith.constant 608 : index
    %c0_35 = arith.constant 0 : index
    %101 = vector.load %arg2[%c608, %c0_35] : memref<1024x128xbf16, #tpu.memory_space<vmem>>, vector<30x20xbf16>
    %cst_36 = arith.constant dense<0.000000e+00> : vector<8x20xf32>
    %102 = tpu.matmul %100, %101, %cst_36 {dimension_numbers = #tpu.dot_dimension_numbers<[1], [0], [0], [1], [0, 0, 1, 1], [], []>} : vector<8x30xbf16>, vector<30x20xbf16>, vector<8x20xf32> -> vector<8x20xf32>
    %c6 = arith.constant 6 : index
    %c0_37 = arith.constant 0 : index
    %103 = vector.load %arg5[%c6, %c0_37] : memref<11x512xf32, #tpu.memory_space<vmem>>, vector<1x20xf32>
    %104 = vector.broadcast %103 : vector<1x20xf32> to vector<8x20xf32>
    %105 = arith.addf %102, %104 : vector<8x20xf32>
    %cst_38 = arith.constant 0.000000e+00 : f32
    %106 = vector.broadcast %cst_38 : f32 to vector<8x20xf32>
    %107 = arith.cmpf ogt, %105, %106 : vector<8x20xf32>
    %cst_39 = arith.constant 0.000000e+00 : f32
    %108 = vector.broadcast %cst_39 : f32 to vector<8x20xf32>
    %109 = arith.minimumf %105, %108 : vector<8x20xf32>
    %110 = math.exp %109 : vector<8x20xf32>
    %cst_40 = arith.constant 1.000000e+00 : f32
    %111 = vector.broadcast %cst_40 : f32 to vector<8x20xf32>
    %112 = arith.subf %110, %111 : vector<8x20xf32>
    %113 = arith.select %107, %105, %112 : vector<8x20xi1>, vector<8x20xf32>
    %114 = vector.extract_strided_slice %0 {offsets = [0, 0], sizes = [8, 48], strides = [1, 1]} : vector<8x208xf32> to vector<8x48xf32>
    %115 = tpu.concatenate %114, %35, %113 in 1 : vector<8x48xf32>, vector<8x4xf32>, vector<8x20xf32> -> vector<8x72xf32>
    %116 = arith.truncf %115 : vector<8x72xf32> to vector<8x72xbf16>
    %c0_41 = arith.constant 0 : index
    %c0_42 = arith.constant 0 : index
    %117 = vector.load %arg3[%c0_41, %c0_42] : memref<72x512xbf16, #tpu.memory_space<vmem>>, vector<72x512xbf16>
    %cst_43 = arith.constant dense<0.000000e+00> : vector<8x512xf32>
    %118 = tpu.matmul %116, %117, %cst_43 {dimension_numbers = #tpu.dot_dimension_numbers<[1], [0], [0], [1], [0, 0, 1, 1], [], []>} : vector<8x72xbf16>, vector<72x512xbf16>, vector<8x512xf32> -> vector<8x512xf32>
    %c7 = arith.constant 7 : index
    %c0_44 = arith.constant 0 : index
    %119 = vector.load %arg5[%c7, %c0_44] : memref<11x512xf32, #tpu.memory_space<vmem>>, vector<1x512xf32>
    %120 = vector.broadcast %119 : vector<1x512xf32> to vector<8x512xf32>
    %121 = arith.addf %118, %120 : vector<8x512xf32>
    %cst_45 = arith.constant 0.000000e+00 : f32
    %122 = vector.broadcast %cst_45 : f32 to vector<8x512xf32>
    %123 = arith.cmpf ogt, %121, %122 : vector<8x512xf32>
    %cst_46 = arith.constant 0.000000e+00 : f32
    %124 = vector.broadcast %cst_46 : f32 to vector<8x512xf32>
    %125 = arith.minimumf %121, %124 : vector<8x512xf32>
    %126 = math.exp %125 : vector<8x512xf32>
    %cst_47 = arith.constant 1.000000e+00 : f32
    %127 = vector.broadcast %cst_47 : f32 to vector<8x512xf32>
    %128 = arith.subf %126, %127 : vector<8x512xf32>
    %129 = arith.select %123, %121, %128 : vector<8x512xi1>, vector<8x512xf32>
    %130 = arith.truncf %129 : vector<8x512xf32> to vector<8x512xbf16>
    %c0_48 = arith.constant 0 : index
    %c0_49 = arith.constant 0 : index
    %131 = vector.load %arg4[%c0_48, %c0_49] : memref<512x256xbf16, #tpu.memory_space<vmem>>, vector<512x256xbf16>
    %cst_50 = arith.constant dense<0.000000e+00> : vector<8x256xf32>
    %132 = tpu.matmul %130, %131, %cst_50 {dimension_numbers = #tpu.dot_dimension_numbers<[1], [0], [0], [1], [0, 0, 1, 1], [], []>} : vector<8x512xbf16>, vector<512x256xbf16>, vector<8x256xf32> -> vector<8x256xf32>
    %c8 = arith.constant 8 : index
    %c0_51 = arith.constant 0 : index
    %133 = vector.load %arg5[%c8, %c0_51] : memref<11x512xf32, #tpu.memory_space<vmem>>, vector<1x256xf32>
    %134 = vector.broadcast %133 : vector<1x256xf32> to vector<8x256xf32>
    %135 = arith.addf %132, %134 : vector<8x256xf32>
    %cst_52 = arith.constant 0.000000e+00 : f32
    %136 = vector.broadcast %cst_52 : f32 to vector<8x256xf32>
    %137 = arith.cmpf ogt, %135, %136 : vector<8x256xf32>
    %cst_53 = arith.constant 0.000000e+00 : f32
    %138 = vector.broadcast %cst_53 : f32 to vector<8x256xf32>
    %139 = arith.minimumf %135, %138 : vector<8x256xf32>
    %140 = math.exp %139 : vector<8x256xf32>
    %cst_54 = arith.constant 1.000000e+00 : f32
    %141 = vector.broadcast %cst_54 : f32 to vector<8x256xf32>
    %142 = arith.subf %140, %141 : vector<8x256xf32>
    %143 = arith.select %137, %135, %142 : vector<8x256xi1>, vector<8x256xf32>
    %144 = arith.truncf %143 : vector<8x256xf32> to vector<8x256xbf16>
    %c768 = arith.constant 768 : index
    %c0_55 = arith.constant 0 : index
    %145 = vector.load %arg2[%c768, %c0_55] : memref<1024x128xbf16, #tpu.memory_space<vmem>>, vector<256x128xbf16>
    %cst_56 = arith.constant dense<0.000000e+00> : vector<8x128xf32>
    %146 = tpu.matmul %144, %145, %cst_56 {dimension_numbers = #tpu.dot_dimension_numbers<[1], [0], [0], [1], [0, 0, 1, 1], [], []>} : vector<8x256xbf16>, vector<256x128xbf16>, vector<8x128xf32> -> vector<8x128xf32>
    %c9 = arith.constant 9 : index
    %c0_57 = arith.constant 0 : index
    %147 = vector.load %arg5[%c9, %c0_57] : memref<11x512xf32, #tpu.memory_space<vmem>>, vector<1x128xf32>
    %148 = vector.broadcast %147 : vector<1x128xf32> to vector<8x128xf32>
    %149 = arith.addf %146, %148 : vector<8x128xf32>
    %cst_58 = arith.constant 0.000000e+00 : f32
    %150 = vector.broadcast %cst_58 : f32 to vector<8x128xf32>
    %151 = arith.cmpf ogt, %149, %150 : vector<8x128xf32>
    %cst_59 = arith.constant 0.000000e+00 : f32
    %152 = vector.broadcast %cst_59 : f32 to vector<8x128xf32>
    %153 = arith.minimumf %149, %152 : vector<8x128xf32>
    %154 = math.exp %153 : vector<8x128xf32>
    %cst_60 = arith.constant 1.000000e+00 : f32
    %155 = vector.broadcast %cst_60 : f32 to vector<8x128xf32>
    %156 = arith.subf %154, %155 : vector<8x128xf32>
    %157 = arith.select %151, %149, %156 : vector<8x128xi1>, vector<8x128xf32>
    %158 = arith.truncf %157 : vector<8x128xf32> to vector<8x128xbf16>
    %c640 = arith.constant 640 : index
    %c0_61 = arith.constant 0 : index
    %159 = vector.load %arg2[%c640, %c0_61] : memref<1024x128xbf16, #tpu.memory_space<vmem>>, vector<128x128xbf16>
    %cst_62 = arith.constant dense<0.000000e+00> : vector<8x128xf32>
    %160 = tpu.matmul %158, %159, %cst_62 {dimension_numbers = #tpu.dot_dimension_numbers<[1], [0], [0], [1], [0, 0, 1, 1], [], []>} : vector<8x128xbf16>, vector<128x128xbf16>, vector<8x128xf32> -> vector<8x128xf32>
    %c10 = arith.constant 10 : index
    %c0_63 = arith.constant 0 : index
    %161 = vector.load %arg5[%c10, %c0_63] : memref<11x512xf32, #tpu.memory_space<vmem>>, vector<1x128xf32>
    %162 = vector.broadcast %161 : vector<1x128xf32> to vector<8x128xf32>
    %163 = arith.addf %160, %162 : vector<8x128xf32>
    %c0_64 = arith.constant 0 : index
    %c0_65 = arith.constant 0 : index
    %164 = vector.load %arg6[%c0_64, %c0_65] : memref<8x128xf32, #tpu.memory_space<vmem>>, vector<8x128xf32>
    tpu.vector_store %arg6[%c0_64, %c0_65], %163 {strides = array<i32>} : memref<8x128xf32, #tpu.memory_space<vmem>>, vector<8x128xf32>,
    return
  }
  func.func @transform_0(%arg0: i32) -> (i32, i32) {
    %c0_i32 = arith.constant 0 : i32
    %c0_i32_0 = arith.constant 0 : i32
    return %arg0, %c0_i32 : i32, i32
  }
  func.func @transform_1(%arg0: i32) -> (i32, i32) {
    %c0_i32 = arith.constant 0 : i32
    %c0_i32_0 = arith.constant 0 : i32
    %c0_i32_1 = arith.constant 0 : i32
    return %c0_i32, %c0_i32_0 : i32, i32
  }
  func.func @transform_2(%arg0: i32) -> (i32, i32) {
    %c0_i32 = arith.constant 0 : i32
    %c0_i32_0 = arith.constant 0 : i32
    %c0_i32_1 = arith.constant 0 : i32
    return %c0_i32, %c0_i32_0 : i32, i32
  }
  func.func @transform_3(%arg0: i32) -> (i32, i32) {
    %c0_i32 = arith.constant 0 : i32
    %c0_i32_0 = arith.constant 0 : i32
    %c0_i32_1 = arith.constant 0 : i32
    return %c0_i32, %c0_i32_0 : i32, i32
  }
  func.func @transform_4(%arg0: i32) -> (i32, i32) {
    %c0_i32 = arith.constant 0 : i32
    %c0_i32_0 = arith.constant 0 : i32
    %c0_i32_1 = arith.constant 0 : i32
    return %c0_i32, %c0_i32_0 : i32, i32
  }
  func.func @transform_5(%arg0: i32) -> (i32, i32) {
    %c0_i32 = arith.constant 0 : i32
    %c0_i32_0 = arith.constant 0 : i32
    return %arg0, %c0_i32 : i32, i32
  }
}

</mosaic_0001>

<llo_original>
// kernel: hardware_vision_forward.1
$region0: #{hardware_vision_forward.1}
  #allocation0 [shape = 'u32[]', space=smem, size = 0x4, offset = 0x4, fixed_abs, tag = 'smem constant byte address 0x4 - core index']
  #allocation1 [shape = 'u32[144,128]{1,0:T(1,128)}', space=vmem, size = 0x12000, scoped, tag = 'internal scratch']
  %s0 = inlined_call_operand.vmem [shape: f32[8,208], index: 0, kind: input, shape index: {}]
  %s1 = inlined_call_operand.hbm [shape: bf16[1024,128], index: 1, kind: input, shape index: {}]
  %s2 = inlined_call_operand.hbm [shape: bf16[72,512], index: 2, kind: input, shape index: {}]
  %s3 = inlined_call_operand.hbm [shape: bf16[512,256], index: 3, kind: input, shape index: {}]
  %s4 = inlined_call_operand.hbm [shape: f32[11,512], index: 4, kind: input, shape index: {}]
  %s5 = inlined_call_operand.vmem [shape: f32[8,128], index: 5, kind: output, shape index: {}]
  %s6 = sld [smem:[#allocation0]]
  $region46: #{hardware_vision_forward.1} parent=0
    _
  %s8 = ssub.s32 1, %s6
  %s9 = scalar_select 0, %s8, %s6
  $region1: #{hardware_vision_forward.1} parent=0
    #allocation2 [shape = 'u8[262144]{0}', space=vmem, size = 0x40000, scoped, tag = 'input window, operand 1, single buffered']
    #allocation3 [shape = 's32[1]{0}', space=sflag, size = 0x4, scoped, tag = 'scoped memory for hardware_vision_forward.1']
    #allocation4 [shape = 'u8[73728]{0}', space=vmem, size = 0x12000, scoped, tag = 'input window, operand 2, single buffered']
    #allocation5 [shape = 's32[1]{0}', space=sflag, size = 0x4, scoped, tag = 'scoped memory for hardware_vision_forward.1']
    #allocation6 [shape = 'u8[262144]{0}', space=vmem, size = 0x40000, scoped, tag = 'input window, operand 3, single buffered']
    #allocation7 [shape = 'u8[32768]{0}', space=vmem, size = 0x8000, scoped, tag = 'input window, operand 4, single buffered']
    #allocation8 [shape = 's32[1]{0}', space=sflag, size = 0x4, scoped, tag = 'scoped memory for hardware_vision_forward.1']
    %10 = vsyncpa [#allocation3], 0
    %11 = vsyncpa [#allocation5], 0
    %12 = vsyncpa [#allocation8], 0
    // Predicated region
    $region2: #{hardware_vision_forward.1} parent=1 // pred_check
      _
    $region3: #{hardware_vision_forward.1} parent=1 // pred_check_branch
      %14 = sbr.rel (0) target = $region5
    $region4: #{hardware_vision_forward.1} parent=1 // pred_region
      _
    $region5: #{hardware_vision_forward.1} parent=1 // pred_fallthru
      _
    // Predicated region
    $region6: #{hardware_vision_forward.1} parent=1 // pred_check
      _
    $region7: #{hardware_vision_forward.1} parent=1 // pred_check_branch
      %16 = sbr.rel (0) target = $region9
    $region8: #{hardware_vision_forward.1} parent=1 // pred_region
      %s18 = ssub.s32 8192, 8192
      %19 = vsyncadd [#allocation3], %s18
      %s20 = sshll.u32 [#allocation2], 4
      %s21 = int_to_ptr.vmem [resolvable:$true] %s20
      %26 = dma.hbm_to_vmem [thread:$0]  %s1, 8192, %s21, [#allocation3], 64, 64, 4
    $region9: #{hardware_vision_forward.1} parent=1 // pred_fallthru
      _
    // Predicated region
    $region10: #{hardware_vision_forward.1} parent=1 // pred_check
      _
    $region11: #{hardware_vision_forward.1} parent=1 // pred_check_branch
      %28 = sbr.rel (0) target = $region13
    $region12: #{hardware_vision_forward.1} parent=1 // pred_region
      %s30 = ssub.s32 2304, 2304
      %31 = vsyncadd [#allocation5], %s30
      %s32 = sshll.u32 [#allocation4], 4
      %s33 = int_to_ptr.vmem [resolvable:$true] %s32
      %38 = dma.hbm_to_vmem [thread:$0]  %s2, 2304, %s33, [#allocation5], 256, 256, 16
    $region13: #{hardware_vision_forward.1} parent=1 // pred_fallthru
      _
    // Predicated region
    $region14: #{hardware_vision_forward.1} parent=1 // pred_check
      _
    $region15: #{hardware_vision_forward.1} parent=1 // pred_check_branch
      %40 = sbr.rel (0) target = $region17
    $region16: #{hardware_vision_forward.1} parent=1 // pred_region
      %s42 = ssub.s32 8192, 8192
      %43 = vsyncadd [#allocation5], %s42
      %s44 = sshll.u32 [#allocation6], 4
      %s45 = int_to_ptr.vmem [resolvable:$true] %s44
      %50 = dma.hbm_to_vmem [thread:$0]  %s3, 8192, %s45, [#allocation5], 128, 128, 8
    $region17: #{hardware_vision_forward.1} parent=1 // pred_fallthru
      _
    // Predicated region
    $region18: #{hardware_vision_forward.1} parent=1 // pred_check
      _
    $region19: #{hardware_vision_forward.1} parent=1 // pred_check_branch
      %52 = sbr.rel (0) target = $region21
    $region20: #{hardware_vision_forward.1} parent=1 // pred_region
      %s54 = ssub.s32 1024, 1024
      %55 = vsyncadd [#allocation8], %s54
      %s56 = sshll.u32 [#allocation7], 4
      %s57 = int_to_ptr.vmem [resolvable:$true] %s56
      %62 = dma.hbm_to_vmem [thread:$0]  %s4, 1024, %s57, [#allocation8], 512, 512, 32
    $region21: #{hardware_vision_forward.1} parent=1 // pred_fallthru
      _
    // Predicated region
    $region22: #{hardware_vision_forward.1} parent=1 // pred_check
      _
    $region23: #{hardware_vision_forward.1} parent=1 // pred_check_branch
      %64 = sbr.rel (0) target = $region25
    $region24: #{hardware_vision_forward.1} parent=1 // pred_region
      %65 = dma.done [#allocation3], 8192
    $region25: #{hardware_vision_forward.1} parent=1 // pred_fallthru
      _
    // Predicated region
    $region26: #{hardware_vision_forward.1} parent=1 // pred_check
      _
    $region27: #{hardware_vision_forward.1} parent=1 // pred_check_branch
      %67 = sbr.rel (0) target = $region29
    $region28: #{hardware_vision_forward.1} parent=1 // pred_region
      %68 = dma.done [#allocation5], 2304
    $region29: #{hardware_vision_forward.1} parent=1 // pred_fallthru
      _
    // Predicated region
    $region30: #{hardware_vision_forward.1} parent=1 // pred_check
      _
    $region31: #{hardware_vision_forward.1} parent=1 // pred_check_branch
      %70 = sbr.rel (0) target = $region33
    $region32: #{hardware_vision_forward.1} parent=1 // pred_region
      %71 = dma.done [#allocation5], 8192
    $region33: #{hardware_vision_forward.1} parent=1 // pred_fallthru
      _
    // Predicated region
    $region34: #{hardware_vision_forward.1} parent=1 // pred_check
      _
    $region35: #{hardware_vision_forward.1} parent=1 // pred_check_branch
      %73 = sbr.rel (0) target = $region37
    $region36: #{hardware_vision_forward.1} parent=1 // pred_region
      %74 = dma.done [#allocation8], 1024
    $region37: #{hardware_vision_forward.1} parent=1 // pred_fallthru
      _
    %v76 = vld [vmem:[%s0] sm:$0xff]
    %v77 = vld [vmem:[%s0 + $0x8] sm:$0xff]
    %v78 = vpack.c.bf16 %v76, %v76
    %v79 = vld [vmem:[#allocation2] sm:$0xf]
    %v80 = vld [vmem:[#allocation2 + $0x4] sm:$0xf]
    %v81 = vld [vmem:[#allocation7] ss:$0 sm:$0xff]
    %v84 = vunpack.c.l.b16 %v79
    %v85 = vunpack.c.l.b16 %v80
    %v86 = vpack.c.b16 %v85, %v84
    %vm88 = vcmask 130048
    %v90 = vsel %vm88, %v78, 0
    %92 = vmatprep.subr.bf16.mxu0 0
    %93 = vmatpush1.bf16.msra.mxu0 %v86
    %94 = vmatprep.subr.bf16.mxu0 0
    %95 = vmatpush1.bf16.msra.mxu0 0
    %96 = vmatprep.subr.bf16.mxu0 0
    %97 = vmatpush1.bf16.msra.mxu0 0
    %98 = vmatprep.subr.bf16.mxu0 0
    %99 = vmatpush1.bf16.msra.mxu0 0
    %100 = vmatprep.subr.bf16.mxu0 0
    %101 = vmatpush1.bf16.msra.mxu0 0
    %102 = vmatprep.subr.bf16.mxu0 0
    %103 = vmatpush1.bf16.msra.mxu0 0
    %104 = vmatprep.subr.bf16.mxu0 0
    %105 = vmatpush1.bf16.msra.mxu0 0
    %106 = vmatprep.subr.bf16.mxu0 0
    %107 = vmatpush1.bf16.msra.mxu0 0
    %108 = vmatprep.subr.bf16.mxu0 0
    %109 = vmatpush1.bf16.msra.mxu0 0
    %110 = vmatprep.subr.bf16.mxu0 0
    %111 = vmatpush1.bf16.msra.mxu0 0
    %112 = vmatprep.subr.bf16.mxu0 0
    %113 = vmatpush1.bf16.msra.mxu0 0
    %114 = vmatprep.subr.bf16.mxu0 0
    %115 = vmatpush1.bf16.msra.mxu0 0
    %116 = vmatprep.subr.bf16.mxu0 0
    %117 = vmatpush1.bf16.msra.mxu0 0
    %118 = vmatprep.subr.bf16.mxu0 0
    %119 = vmatpush1.bf16.msra.mxu0 0
    %120 = vmatprep.subr.bf16.mxu0 0
    %121 = vmatpush1.bf16.msra.mxu0 0
    %122 = vmatprep.subr.bf16.mxu0 0
    %123 = vmatpush1.bf16.msra.mxu0 0
    %124 = vmatprep.mubr.bf16.mxu0 0
    %125 = vmatmul.mubr.bf16.gmra.mrb[0].mxu0 %v90
    %v126 = vpop.f32.mrb[0].mxu0
    %v127 = vadd.f32 %v81, %v126
    %v128 = vpop.f32.mrb[0].mxu0
    %v129 = vpop.f32.mrb[0].mxu0
    %v130 = vpop.f32.mrb[0].mxu0
    %131 = vdwg.mxu0
    %vm132 = vcmp.gt.f32.partialorder %v127, 0.0
    %v133 = vmin.f32 %v127, 0.0
    %v134 = vmul.f32 %v133, 1.442695
    %v135 = vpow.pop %v134
    %v136 = vsub.f32 %v135, 1.0
    %v137 = vsel %vm132, %v127, %v136
    %v138 = vpack.c.bf16 %v137, %v137
    %v139 = vld [vmem:[#allocation2 + $0x8] sm:$0xf]
    %v140 = vld [vmem:[#allocation2 + $0xc] sm:$0xf]
    %v141 = vld [vmem:[#allocation2 + $0x10] sm:$0xf]
    %v142 = vld [vmem:[#allocation2 + $0x14] sm:$0xf]
    %v143 = vld [vmem:[#allocation2 + $0x18] sm:$0xf]
    %v144 = vld [vmem:[#allocation2 + $0x1c] sm:$0xf]
    %v145 = vld [vmem:[#allocation2 + $0x20] sm:$0xf]
    %v146 = vld [vmem:[#allocation2 + $0x24] sm:$0xf]
    %v147 = vld [vmem:[#allocation2 + $0x28] sm:$0xf]
    %v148 = vld [vmem:[#allocation2 + $0x2c] sm:$0xf]
    %v149 = vld [vmem:[#allocation2 + $0x30] sm:$0xf]
    %v150 = vld [vmem:[#allocation2 + $0x34] sm:$0xf]
    %v151 = vld [vmem:[#allocation2 + $0x38] sm:$0xf]
    %v152 = vld [vmem:[#allocation2 + $0x3c] sm:$0xf]
    %v153 = vld [vmem:[#allocation2 + $0x40] sm:$0xf]
    %v154 = vld [vmem:[#allocation2 + $0x44] sm:$0xf]
    %v155 = vld [vmem:[#allocation7 + $0x1] ss:$0 sm:$0xff]
    %v172 = vunpack.c.l.b16 %v139
    %v173 = vunpack.c.l.b16 %v140
    %v174 = vunpack.c.l.b16 %v141
    %v175 = vunpack.c.l.b16 %v142
    %v176 = vunpack.c.l.b16 %v143
    %v177 = vunpack.c.l.b16 %v144
    %v178 = vunpack.c.l.b16 %v145
    %v179 = vunpack.c.l.b16 %v146
    %v180 = vunpack.c.l.b16 %v147
    %v181 = vunpack.c.l.b16 %v148
    %v182 = vunpack.c.l.b16 %v149
    %v183 = vunpack.c.l.b16 %v150
    %v184 = vunpack.c.l.b16 %v151
    %v185 = vunpack.c.l.b16 %v152
    %v186 = vunpack.c.l.b16 %v153
    %v187 = vunpack.c.l.b16 %v154
    %v188 = vpack.c.b16 %v173, %v172
    %v189 = vpack.c.b16 %v175, %v174
    %v190 = vpack.c.b16 %v177, %v176
    %v191 = vpack.c.b16 %v179, %v178
    %v192 = vpack.c.b16 %v181, %v180
    %v193 = vpack.c.b16 %v183, %v182
    %v194 = vpack.c.b16 %v185, %v184
    %v195 = vpack.c.b16 %v187, %v186
    %204 = vmatprep.subr.bf16.mxu0 0
    %205 = vmatpush1.bf16.msra.mxu0 %v188
    %206 = vmatprep.subr.bf16.mxu0 0
    %207 = vmatpush1.bf16.msra.mxu0 %v189
    %208 = vmatprep.subr.bf16.mxu0 0
    %209 = vmatpush1.bf16.msra.mxu0 %v190
    %210 = vmatprep.subr.bf16.mxu0 0
    %211 = vmatpush1.bf16.msra.mxu0 %v191
    %212 = vmatprep.subr.bf16.mxu0 0
    %213 = vmatpush1.bf16.msra.mxu0 %v192
    %214 = vmatprep.subr.bf16.mxu0 0
    %215 = vmatpush1.bf16.msra.mxu0 %v193
    %216 = vmatprep.subr.bf16.mxu0 0
    %217 = vmatpush1.bf16.msra.mxu0 %v194
    %218 = vmatprep.subr.bf16.mxu0 0
    %219 = vmatpush1.bf16.msra.mxu0 %v195
    %220 = vmatprep.subr.bf16.mxu0 0
    %221 = vmatpush1.bf16.msra.mxu0 0
    %222 = vmatprep.subr.bf16.mxu0 0
    %223 = vmatpush1.bf16.msra.mxu0 0
    %224 = vmatprep.subr.bf16.mxu0 0
    %225 = vmatpush1.bf16.msra.mxu0 0
    %226 = vmatprep.subr.bf16.mxu0 0
    %227 = vmatpush1.bf16.msra.mxu0 0
    %228 = vmatprep.subr.bf16.mxu0 0
    %229 = vmatpush1.bf16.msra.mxu0 0
    %230 = vmatprep.subr.bf16.mxu0 0
    %231 = vmatpush1.bf16.msra.mxu0 0
    %232 = vmatprep.subr.bf16.mxu0 0
    %233 = vmatpush1.bf16.msra.mxu0 0
    %234 = vmatprep.subr.bf16.mxu0 0
    %235 = vmatpush1.bf16.msra.mxu0 0
    %236 = vmatprep.mubr.bf16.mxu0 0
    %237 = vmatmul.mubr.bf16.gmra.mrb[0].mxu0 %v138
    %v238 = vpop.f32.mrb[0].mxu0
    %v239 = vadd.f32 %v155, %v238
    %v240 = vpop.f32.mrb[0].mxu0
    %v241 = vpop.f32.mrb[0].mxu0
    %v242 = vpop.f32.mrb[0].mxu0
    %243 = vdwg.mxu0
    %vm244 = vcmp.gt.f32.partialorder %v239, 0.0
    %v245 = vmin.f32 %v239, 0.0
    %v246 = vmul.f32 %v245, 1.442695
    %v247 = vpow.pop %v246
    %v248 = vsub.f32 %v247, 1.0
    %v249 = vsel %vm244, %v239, %v248
    %v250 = vpack.c.bf16 %v249, %v249
    %v251 = vld [vmem:[#allocation2 + $0x48] sm:$0xf]
    %v252 = vld [vmem:[#allocation2 + $0x4c] sm:$0xf]
    %v253 = vld [vmem:[#allocation2 + $0x50] sm:$0xf]
    %v254 = vld [vmem:[#allocation2 + $0x54] sm:$0xf]
    %v255 = vld [vmem:[#allocation2 + $0x58] sm:$0xf]
    %v256 = vld [vmem:[#allocation2 + $0x5c] sm:$0xf]
    %v257 = vld [vmem:[#allocation2 + $0x60] sm:$0xf]
    %v258 = vld [vmem:[#allocation2 + $0x64] sm:$0xf]
    %v259 = vld [vmem:[#allocation7 + $0x2] ss:$0 sm:$0xff]
    %v268 = vunpack.c.l.b16 %v251
    %v269 = vunpack.c.l.b16 %v252
    %v270 = vunpack.c.l.b16 %v253
    %v271 = vunpack.c.l.b16 %v254
    %v272 = vunpack.c.l.b16 %v255
    %v273 = vunpack.c.l.b16 %v256
    %v274 = vunpack.c.l.b16 %v257
    %v275 = vunpack.c.l.b16 %v258
    %v276 = vpack.c.b16 %v269, %v268
    %v277 = vpack.c.b16 %v271, %v270
    %v278 = vpack.c.b16 %v273, %v272
    %v279 = vpack.c.b16 %v275, %v274
    %vm284 = vcmask 523264
    %v286 = vsel %vm284, %v250, 0
    %288 = vmatprep.subr.bf16.mxu0 0
    %289 = vmatpush1.bf16.msra.mxu0 %v276
    %290 = vmatprep.subr.bf16.mxu0 0
    %291 = vmatpush1.bf16.msra.mxu0 %v277
    %292 = vmatprep.subr.bf16.mxu0 0
    %293 = vmatpush1.bf16.msra.mxu0 %v278
    %294 = vmatprep.subr.bf16.mxu0 0
    %295 = vmatpush1.bf16.msra.mxu0 %v279
    %296 = vmatprep.subr.bf16.mxu0 0
    %297 = vmatpush1.bf16.msra.mxu0 0
    %298 = vmatprep.subr.bf16.mxu0 0
    %299 = vmatpush1.bf16.msra.mxu0 0
    %300 = vmatprep.subr.bf16.mxu0 0
    %301 = vmatpush1.bf16.msra.mxu0 0
    %302 = vmatprep.subr.bf16.mxu0 0
    %303 = vmatpush1.bf16.msra.mxu0 0
    %304 = vmatprep.subr.bf16.mxu0 0
    %305 = vmatpush1.bf16.msra.mxu0 0
    %306 = vmatprep.subr.bf16.mxu0 0
    %307 = vmatpush1.bf16.msra.mxu0 0
    %308 = vmatprep.subr.bf16.mxu0 0
    %309 = vmatpush1.bf16.msra.mxu0 0
    %310 = vmatprep.subr.bf16.mxu0 0
    %311 = vmatpush1.bf16.msra.mxu0 0
    %312 = vmatprep.subr.bf16.mxu0 0
    %313 = vmatpush1.bf16.msra.mxu0 0
    %314 = vmatprep.subr.bf16.mxu0 0
    %315 = vmatpush1.bf16.msra.mxu0 0
    %316 = vmatprep.subr.bf16.mxu0 0
    %317 = vmatpush1.bf16.msra.mxu0 0
    %318 = vmatprep.subr.bf16.mxu0 0
    %319 = vmatpush1.bf16.msra.mxu0 0
    %320 = vmatprep.mubr.bf16.mxu0 0
    %321 = vmatmul.mubr.bf16.gmra.mrb[0].mxu0 %v286
    %v322 = vpop.f32.mrb[0].mxu0
    %v323 = vadd.f32 %v259, %v322
    %v324 = vpop.f32.mrb[0].mxu0
    %v325 = vpop.f32.mrb[0].mxu0
    %v326 = vpop.f32.mrb[0].mxu0
    %327 = vdwg.mxu0
    %329 = vrot.lane.b32.xlu0 %v76, 112
    %v330 = vpop.permute.xlu0 %329
    %332 = vrot.lane.b32.xlu0 %v76, 96
    %v333 = vpop.permute.xlu0 %332
    %335 = vrot.lane.b32.xlu0 %v76, 80
    %v336 = vpop.permute.xlu0 %335
    %338 = vrot.lane.b32.xlu0 %v76, 64
    %v339 = vpop.permute.xlu0 %338
    %342 = vrot.lane.b32.xlu0 %v77, 48
    %v343 = vpop.permute.xlu0 %342
    %345 = vrot.lane.b32.xlu0 %v77, 32
    %v346 = vpop.permute.xlu0 %345
    %348 = vrot.lane.b32.xlu0 %v77, 16
    %v349 = vpop.permute.xlu0 %348
    %351 = vrot.lane.b32.xlu0 %v77, 112
    %v352 = vpop.permute.xlu0 %351
    %v354 = vpack.c.bf16 %v330, %v76
    %v355 = vpack.c.bf16 %v336, %v333
    %v356 = vpack.c.bf16 %v343, %v339
    %v357 = vpack.c.bf16 %v349, %v346
    %v358 = vpack.c.bf16 %v352, %v77
    %v359 = vld [vmem:[#allocation2 + $0x68] sm:$0xf]
    %v360 = vld [vmem:[#allocation2 + $0x6c] sm:$0xf]
    %v361 = vld [vmem:[#allocation7 + $0x3] ss:$0 sm:$0xff]
    %367 = vrot.lane.b32.xlu0 %v354, 80
    %v368 = vpop.permute.xlu0 %367
    %369 = vrot.lane.b32.xlu0 %v355, 80
    %v370 = vpop.permute.xlu0 %369
    %371 = vrot.lane.b32.xlu0 %v356, 80
    %v372 = vpop.permute.xlu0 %371
    %373 = vrot.lane.b32.xlu0 %v357, 80
    %v374 = vpop.permute.xlu0 %373
    %375 = vrot.lane.b32.xlu0 %v358, 80
    %v376 = vpop.permute.xlu0 %375
    %v379 = vunpack.c.l.b16 %v359
    %v380 = vunpack.c.l.b16 %v360
    %v381 = vpack.c.b16 %v380, %v379
    %v384 = vsel %vm88, %v368, 0
    %v387 = vsel %vm88, %v370, 0
    %v390 = vsel %vm88, %v372, 0
    %v393 = vsel %vm88, %v374, 0
    %v396 = vsel %vm88, %v376, 0
    %398 = vmatprep.subr.bf16.mxu0 0
    %399 = vmatpush1.bf16.msra.mxu0 %v381
    %400 = vmatprep.subr.bf16.mxu0 0
    %401 = vmatpush1.bf16.msra.mxu0 0
    %402 = vmatprep.subr.bf16.mxu0 0
    %403 = vmatpush1.bf16.msra.mxu0 0
    %404 = vmatprep.subr.bf16.mxu0 0
    %405 = vmatpush1.bf16.msra.mxu0 0
    %406 = vmatprep.subr.bf16.mxu0 0
    %407 = vmatpush1.bf16.msra.mxu0 0
    %408 = vmatprep.subr.bf16.mxu0 0
    %409 = vmatpush1.bf16.msra.mxu0 0
    %410 = vmatprep.subr.bf16.mxu0 0
    %411 = vmatpush1.bf16.msra.mxu0 0
    %412 = vmatprep.subr.bf16.mxu0 0
    %413 = vmatpush1.bf16.msra.mxu0 0
    %414 = vmatprep.subr.bf16.mxu0 0
    %415 = vmatpush1.bf16.msra.mxu0 0
    %416 = vmatprep.subr.bf16.mxu0 0
    %417 = vmatpush1.bf16.msra.mxu0 0
    %418 = vmatprep.subr.bf16.mxu0 0
    %419 = vmatpush1.bf16.msra.mxu0 0
    %420 = vmatprep.subr.bf16.mxu0 0
    %421 = vmatpush1.bf16.msra.mxu0 0
    %422 = vmatprep.subr.bf16.mxu0 0
    %423 = vmatpush1.bf16.msra.mxu0 0
    %424 = vmatprep.subr.bf16.mxu0 0
    %425 = vmatpush1.bf16.msra.mxu0 0
    %426 = vmatprep.subr.bf16.mxu0 0
    %427 = vmatpush1.bf16.msra.mxu0 0
    %428 = vmatprep.subr.bf16.mxu0 0
    %429 = vmatpush1.bf16.msra.mxu0 0
    %430 = vmatprep.mubr.bf16.mxu0 0
    %431 = vmatmul.mubr.bf16.gmra.mrb[0].mxu0 %v384
    %v432 = vpop.f32.mrb[0].mxu0
    %v433 = vadd.f32 %v361, %v432
    %v434 = vpop.f32.mrb[0].mxu0
    %v435 = vpop.f32.mrb[0].mxu0
    %v436 = vadd.f32 %v361, %v435
    %v437 = vpop.f32.mrb[0].mxu0
    %438 = vmatprep.mubr.bf16.mxu0 0
    %439 = vmatmul.mubr.bf16.gmra.mrb[0].mxu0 %v387
    %v440 = vpop.f32.mrb[0].mxu0
    %v441 = vadd.f32 %v361, %v440
    %v442 = vpop.f32.mrb[0].mxu0
    %v443 = vpop.f32.mrb[0].mxu0
    %v444 = vadd.f32 %v361, %v443
    %v445 = vpop.f32.mrb[0].mxu0
    %446 = vmatprep.mubr.bf16.mxu0 0
    %447 = vmatmul.mubr.bf16.gmra.mrb[0].mxu0 %v390
    %v448 = vpop.f32.mrb[0].mxu0
    %v449 = vadd.f32 %v361, %v448
    %v450 = vpop.f32.mrb[0].mxu0
    %v451 = vpop.f32.mrb[0].mxu0
    %v452 = vadd.f32 %v361, %v451
    %v453 = vpop.f32.mrb[0].mxu0
    %454 = vmatprep.mubr.bf16.mxu0 0
    %455 = vmatmul.mubr.bf16.gmra.mrb[0].mxu0 %v393
    %v456 = vpop.f32.mrb[0].mxu0
    %v457 = vadd.f32 %v361, %v456
    %v458 = vpop.f32.mrb[0].mxu0
    %v459 = vpop.f32.mrb[0].mxu0
    %v460 = vadd.f32 %v361, %v459
    %v461 = vpop.f32.mrb[0].mxu0
    %462 = vmatprep.mubr.bf16.mxu0 0
    %463 = vmatmul.mubr.bf16.gmra.mrb[0].mxu0 %v396
    %v464 = vpop.f32.mrb[0].mxu0
    %v465 = vadd.f32 %v361, %v464
    %v466 = vpop.f32.mrb[0].mxu0
    %v467 = vpop.f32.mrb[0].mxu0
    %v468 = vadd.f32 %v361, %v467
    %v469 = vpop.f32.mrb[0].mxu0
    %470 = vdwg.mxu0
    %vm471 = vcmp.gt.f32.partialorder %v433, 0.0
    %vm472 = vcmp.gt.f32.partialorder %v436, 0.0
    %vm473 = vcmp.gt.f32.partialorder %v441, 0.0
    %vm474 = vcmp.gt.f32.partialorder %v444, 0.0
    %vm475 = vcmp.gt.f32.partialorder %v449, 0.0
    %vm476 = vcmp.gt.f32.partialorder %v452, 0.0
    %vm477 = vcmp.gt.f32.partialorder %v457, 0.0
    %vm478 = vcmp.gt.f32.partialorder %v460, 0.0
    %vm479 = vcmp.gt.f32.partialorder %v465, 0.0
    %vm480 = vcmp.gt.f32.partialorder %v468, 0.0
    %v481 = vmin.f32 %v433, 0.0
    %v482 = vmin.f32 %v436, 0.0
    %v483 = vmin.f32 %v441, 0.0
    %v484 = vmin.f32 %v444, 0.0
    %v485 = vmin.f32 %v449, 0.0
    %v486 = vmin.f32 %v452, 0.0
    %v487 = vmin.f32 %v457, 0.0
    %v488 = vmin.f32 %v460, 0.0
    %v489 = vmin.f32 %v465, 0.0
    %v490 = vmin.f32 %v468, 0.0
    %v491 = vmul.f32 %v481, 1.442695
    %v492 = vpow.pop %v491
    %v493 = vmul.f32 %v482, 1.442695
    %v494 = vpow.pop %v493
    %v495 = vmul.f32 %v483, 1.442695
    %v496 = vpow.pop %v495
    %v497 = vmul.f32 %v484, 1.442695
    %v498 = vpow.pop %v497
    %v499 = vmul.f32 %v485, 1.442695
    %v500 = vpow.pop %v499
    %v501 = vmul.f32 %v486, 1.442695
    %v502 = vpow.pop %v501
    %v503 = vmul.f32 %v487, 1.442695
    %v504 = vpow.pop %v503
    %v505 = vmul.f32 %v488, 1.442695
    %v506 = vpow.pop %v505
    %v507 = vmul.f32 %v489, 1.442695
    %v508 = vpow.pop %v507
    %v509 = vmul.f32 %v490, 1.442695
    %v510 = vpow.pop %v509
    %v511 = vsub.f32 %v492, 1.0
    %v512 = vsub.f32 %v494, 1.0
    %v513 = vsub.f32 %v496, 1.0
    %v514 = vsub.f32 %v498, 1.0
    %v515 = vsub.f32 %v500, 1.0
    %v516 = vsub.f32 %v502, 1.0
    %v517 = vsub.f32 %v504, 1.0
    %v518 = vsub.f32 %v506, 1.0
    %v519 = vsub.f32 %v508, 1.0
    %v520 = vsub.f32 %v510, 1.0
    %v521 = vsel %vm471, %v433, %v511
    %v522 = vsel %vm472, %v436, %v512
    %v523 = vsel %vm473, %v441, %v513
    %v524 = vsel %vm474, %v444, %v514
    %v525 = vsel %vm475, %v449, %v515
    %v526 = vsel %vm476, %v452, %v516
    %v527 = vsel %vm477, %v457, %v517
    %v528 = vsel %vm478, %v460, %v518
    %v529 = vsel %vm479, %v465, %v519
    %v530 = vsel %vm480, %v468, %v520
    %532 = vrot.lane.b32.xlu0 %v522, 30
    %v533 = vpop.permute.xlu0 %532
    %536 = vrot.lane.b32.xlu0 %v523, 60
    %v537 = vpop.permute.xlu0 %536
    %540 = vrot.lane.b32.xlu0 %v524, 90
    %v541 = vpop.permute.xlu0 %540
    %544 = vrot.lane.b32.xlu0 %v525, 120
    %v545 = vpop.permute.xlu0 %544
    %548 = vrot.lane.b32.xlu0 %v526, 22
    %v549 = vpop.permute.xlu0 %548
    %552 = vrot.lane.b32.xlu0 %v527, 52
    %v553 = vpop.permute.xlu0 %552
    %556 = vrot.lane.b32.xlu0 %v528, 82
    %v557 = vpop.permute.xlu0 %556
    %560 = vrot.lane.b32.xlu0 %v529, 112
    %v561 = vpop.permute.xlu0 %560
    %564 = vrot.lane.b32.xlu0 %v530, 14
    %v565 = vpop.permute.xlu0 %564
    %vm567 = vcmask 244736
    %v568 = vsel %vm567, %v521, %v533
    %vm569 = vcmask 490496
    %v570 = vsel %vm569, %v568, %v537
    %vm571 = vcmask 736256
    %v572 = vsel %vm571, %v570, %v541
    %vm573 = vcmask 982016
    %v574 = vsel %vm573, %v572, %v545
    %vm575 = vcmask 179200
    %v576 = vsel %vm575, %v545, %v549
    %vm577 = vcmask 424960
    %v578 = vsel %vm577, %v576, %v553
    %vm579 = vcmask 670720
    %v580 = vsel %vm579, %v578, %v557
    %vm581 = vcmask 916480
    %v582 = vsel %vm581, %v580, %v561
    %vm583 = vcmask 113664
    %v584 = vsel %vm583, %v561, %v565
    %v585 = vpack.c.bf16 %v574, %v574
    %v586 = vpack.c.bf16 %v582, %v582
    %v587 = vpack.c.bf16 %v584, %v584
    %v588 = vld [vmem:[#allocation2 + $0x70] sm:$0xf]
    %v589 = vld [vmem:[#allocation2 + $0x74] sm:$0xf]
    %v590 = vld [vmem:[#allocation2 + $0x78] sm:$0xf]
    %v591 = vld [vmem:[#allocation2 + $0x7c] sm:$0xf]
    %v592 = vld [vmem:[#allocation2 + $0x80] sm:$0xf]
    %v593 = vld [vmem:[#allocation2 + $0x84] sm:$0xf]
    %v594 = vld [vmem:[#allocation2 + $0x88] sm:$0xf]
    %v595 = vld [vmem:[#allocation2 + $0x8c] sm:$0xf]
    %v596 = vld [vmem:[#allocation2 + $0x90] sm:$0xf]
    %v597 = vld [vmem:[#allocation2 + $0x94] sm:$0xf]
    %v598 = vld [vmem:[#allocation2 + $0x98] sm:$0xf]
    %v599 = vld [vmem:[#allocation2 + $0x9c] sm:$0xf]
    %v600 = vld [vmem:[#allocation2 + $0xa0] sm:$0xf]
    %v601 = vld [vmem:[#allocation2 + $0xa4] sm:$0xf]
    %v602 = vld [vmem:[#allocation2 + $0xa8] sm:$0xf]
    %v603 = vld [vmem:[#allocation2 + $0xac] sm:$0xf]
    %v604 = vld [vmem:[#allocation2 + $0xb0] sm:$0xf]
    %v605 = vld [vmem:[#allocation2 + $0xb4] sm:$0xf]
    %v606 = vld [vmem:[#allocation2 + $0xb8] sm:$0xf]
    %v607 = vld [vmem:[#allocation2 + $0xbc] sm:$0xf]
    %v608 = vld [vmem:[#allocation2 + $0xc0] sm:$0xf]
    %v609 = vld [vmem:[#allocation2 + $0xc4] sm:$0xf]
    %v610 = vld [vmem:[#allocation2 + $0xc8] sm:$0xf]
    %v611 = vld [vmem:[#allocation2 + $0xcc] sm:$0xf]
    %v612 = vld [vmem:[#allocation2 + $0xd0] sm:$0xf]
    %v613 = vld [vmem:[#allocation2 + $0xd4] sm:$0xf]
    %v614 = vld [vmem:[#allocation2 + $0xd8] sm:$0xf]
    %v615 = vld [vmem:[#allocation2 + $0xdc] sm:$0xf]
    %v616 = vld [vmem:[#allocation2 + $0xe0] sm:$0xf]
    %v617 = vld [vmem:[#allocation2 + $0xe4] sm:$0xf]
    %v618 = vld [vmem:[#allocation2 + $0xe8] sm:$0xf]
    %v619 = vld [vmem:[#allocation2 + $0xec] sm:$0xf]
    %v620 = vld [vmem:[#allocation2 + $0xf0] sm:$0xf]
    %v621 = vld [vmem:[#allocation2 + $0xf4] sm:$0xf]
    %v622 = vld [vmem:[#allocation2 + $0xf8] sm:$0xf]
    %v623 = vld [vmem:[#allocation2 + $0xfc] sm:$0xf]
    %v624 = vld [vmem:[#allocation2 + $0x100] sm:$0xf]
    %v625 = vld [vmem:[#allocation2 + $0x104] sm:$0x3]
    %v626 = vld [vmem:[#allocation7 + $0x4] ss:$0 sm:$0xff]
    %v665 = vunpack.c.l.b16 %v588
    %v666 = vunpack.c.l.b16 %v589
    %v667 = vunpack.c.l.b16 %v590
    %v668 = vunpack.c.l.b16 %v591
    %v669 = vunpack.c.l.b16 %v592
    %v670 = vunpack.c.l.b16 %v593
    %v671 = vunpack.c.l.b16 %v594
    %v672 = vunpack.c.l.b16 %v595
    %v673 = vunpack.c.l.b16 %v596
    %v674 = vunpack.c.l.b16 %v597
    %v675 = vunpack.c.l.b16 %v598
    %v676 = vunpack.c.l.b16 %v599
    %v677 = vunpack.c.l.b16 %v600
    %v678 = vunpack.c.l.b16 %v601
    %v679 = vunpack.c.l.b16 %v602
    %v680 = vunpack.c.l.b16 %v603
    %v681 = vunpack.c.l.b16 %v604
    %v682 = vunpack.c.l.b16 %v605
    %v683 = vunpack.c.l.b16 %v606
    %v684 = vunpack.c.l.b16 %v607
    %v685 = vunpack.c.l.b16 %v608
    %v686 = vunpack.c.l.b16 %v609
    %v687 = vunpack.c.l.b16 %v610
    %v688 = vunpack.c.l.b16 %v611
    %v689 = vunpack.c.l.b16 %v612
    %v690 = vunpack.c.l.b16 %v613
    %v691 = vunpack.c.l.b16 %v614
    %v692 = vunpack.c.l.b16 %v615
    %v693 = vunpack.c.l.b16 %v616
    %v694 = vunpack.c.l.b16 %v617
    %v695 = vunpack.c.l.b16 %v618
    %v696 = vunpack.c.l.b16 %v619
    %v697 = vunpack.c.l.b16 %v620
    %v698 = vunpack.c.l.b16 %v621
    %v699 = vunpack.c.l.b16 %v622
    %v700 = vunpack.c.l.b16 %v623
    %v701 = vunpack.c.l.b16 %v624
    %v702 = vunpack.c.l.b16 %v625
    %v703 = vpack.c.b16 %v666, %v665
    %v704 = vpack.c.b16 %v668, %v667
    %v705 = vpack.c.b16 %v670, %v669
    %v706 = vpack.c.b16 %v672, %v671
    %v707 = vpack.c.b16 %v674, %v673
    %v708 = vpack.c.b16 %v676, %v675
    %v709 = vpack.c.b16 %v678, %v677
    %v710 = vpack.c.b16 %v680, %v679
    %v711 = vpack.c.b16 %v682, %v681
    %v712 = vpack.c.b16 %v684, %v683
    %v713 = vpack.c.b16 %v686, %v685
    %v714 = vpack.c.b16 %v688, %v687
    %v715 = vpack.c.b16 %v690, %v689
    %v716 = vpack.c.b16 %v692, %v691
    %v717 = vpack.c.b16 %v694, %v693
    %v718 = vpack.c.b16 %v696, %v695
    %v719 = vpack.c.b16 %v698, %v697
    %v720 = vpack.c.b16 %v700, %v699
    %v721 = vpack.c.b16 %v702, %v701
    %vm740 = vcmask 359424
    %v742 = vsel %vm740, %v587, 0
    %vm744 = vcmask 1045504
    %v746 = vsel %vm744, %v721, 0
    %748 = vmatprep.subr.bf16.mxu0 0
    %749 = vmatpush1.bf16.msra.mxu0 %v703
    %750 = vmatprep.subr.bf16.mxu0 0
    %751 = vmatpush1.bf16.msra.mxu0 %v704
    %752 = vmatprep.subr.bf16.mxu0 0
    %753 = vmatpush1.bf16.msra.mxu0 %v705
    %754 = vmatprep.subr.bf16.mxu0 0
    %755 = vmatpush1.bf16.msra.mxu0 %v706
    %756 = vmatprep.subr.bf16.mxu0 0
    %757 = vmatpush1.bf16.msra.mxu0 %v707
    %758 = vmatprep.subr.bf16.mxu0 0
    %759 = vmatpush1.bf16.msra.mxu0 %v708
    %760 = vmatprep.subr.bf16.mxu0 0
    %761 = vmatpush1.bf16.msra.mxu0 %v709
    %762 = vmatprep.subr.bf16.mxu0 0
    %763 = vmatpush1.bf16.msra.mxu0 %v710
    %764 = vmatprep.subr.bf16.mxu0 0
    %765 = vmatpush1.bf16.msra.mxu0 %v711
    %766 = vmatprep.subr.bf16.mxu0 0
    %767 = vmatpush1.bf16.msra.mxu0 %v712
    %768 = vmatprep.subr.bf16.mxu0 0
    %769 = vmatpush1.bf16.msra.mxu0 %v713
    %770 = vmatprep.subr.bf16.mxu0 0
    %771 = vmatpush1.bf16.msra.mxu0 %v714
    %772 = vmatprep.subr.bf16.mxu0 0
    %773 = vmatpush1.bf16.msra.mxu0 %v715
    %774 = vmatprep.subr.bf16.mxu0 0
    %775 = vmatpush1.bf16.msra.mxu0 %v716
    %776 = vmatprep.subr.bf16.mxu0 0
    %777 = vmatpush1.bf16.msra.mxu0 %v717
    %778 = vmatprep.subr.bf16.mxu0 0
    %779 = vmatpush1.bf16.msra.mxu0 %v718
    %780 = vmatprep.mubr.bf16.mxu0 %v586
    %781 = vmatmul.mubr.bf16.gmra.mrb[0].mxu0 %v585
    %v782 = vpop.f32.mrb[0].mxu0
    %v783 = vadd.f32 %v626, %v782
    %v784 = vpop.f32.mrb[0].mxu0
    %v785 = vpop.f32.mrb[0].mxu0
    %v786 = vpop.f32.mrb[0].mxu0
    %787 = vdwg.mxu0
    %788 = vmatprep.subr.bf16.mxu0 0
    %789 = vmatpush1.bf16.msra.mxu0 %v719
    %790 = vmatprep.subr.bf16.mxu0 0
    %791 = vmatpush1.bf16.msra.mxu0 %v720
    %792 = vmatprep.subr.bf16.mxu0 0
    %793 = vmatpush1.bf16.msra.mxu0 %v746
    %794 = vmatprep.subr.bf16.mxu0 0
    %795 = vmatpush1.bf16.msra.mxu0 0
    %796 = vmatprep.subr.bf16.mxu0 0
    %797 = vmatpush1.bf16.msra.mxu0 0
    %798 = vmatprep.subr.bf16.mxu0 0
    %799 = vmatpush1.bf16.msra.mxu0 0
    %800 = vmatprep.subr.bf16.mxu0 0
    %801 = vmatpush1.bf16.msra.mxu0 0
    %802 = vmatprep.subr.bf16.mxu0 0
    %803 = vmatpush1.bf16.msra.mxu0 0
    %804 = vmatprep.subr.bf16.mxu0 0
    %805 = vmatpush1.bf16.msra.mxu0 0
    %806 = vmatprep.subr.bf16.mxu0 0
    %807 = vmatpush1.bf16.msra.mxu0 0
    %808 = vmatprep.subr.bf16.mxu0 0
    %809 = vmatpush1.bf16.msra.mxu0 0
    %810 = vmatprep.subr.bf16.mxu0 0
    %811 = vmatpush1.bf16.msra.mxu0 0
    %812 = vmatprep.subr.bf16.mxu0 0
    %813 = vmatpush1.bf16.msra.mxu0 0
    %814 = vmatprep.subr.bf16.mxu0 0
    %815 = vmatpush1.bf16.msra.mxu0 0
    %816 = vmatprep.subr.bf16.mxu0 0
    %817 = vmatpush1.bf16.msra.mxu0 0
    %818 = vmatprep.subr.bf16.mxu0 0
    %819 = vmatpush1.bf16.msra.mxu0 0
    %820 = vmatprep.mubr.bf16.mxu0 0
    %821 = vmatmul.mubr.bf16.gmra.mrb[0].mxu0 %v742
    %v822 = vpop.f32.mrb[0].mxu0
    %v823 = vadd.f32 %v783, %v822
    %v824 = vpop.f32.mrb[0].mxu0
    %v825 = vpop.f32.mrb[0].mxu0
    %v826 = vpop.f32.mrb[0].mxu0
    %827 = vdwg.mxu0
    %vm828 = vcmp.gt.f32.partialorder %v823, 0.0
    %v829 = vmin.f32 %v823, 0.0
    %v830 = vmul.f32 %v829, 1.442695
    %v831 = vpow.pop %v830
    %v832 = vsub.f32 %v831, 1.0
    %v833 = vsel %vm828, %v823, %v832
    %v834 = vpack.c.bf16 %v833, %v833
    %v835 = vld [vmem:[#allocation2 + $0x108] sm:$0xf]
    %v836 = vld [vmem:[#allocation2 + $0x10c] sm:$0xf]
    %v837 = vld [vmem:[#allocation2 + $0x110] sm:$0xf]
    %v838 = vld [vmem:[#allocation2 + $0x114] sm:$0xf]
    %v839 = vld [vmem:[#allocation2 + $0x118] sm:$0xf]
    %v840 = vld [vmem:[#allocation2 + $0x11c] sm:$0xf]
    %v841 = vld [vmem:[#allocation2 + $0x120] sm:$0xf]
    %v842 = vld [vmem:[#allocation2 + $0x124] sm:$0xf]
    %v843 = vld [vmem:[#allocation2 + $0x128] sm:$0xf]
    %v844 = vld [vmem:[#allocation2 + $0x12c] sm:$0xf]
    %v845 = vld [vmem:[#allocation7 + $0x5] ss:$0 sm:$0xff]
    %v856 = vunpack.c.l.b16 %v835
    %v857 = vunpack.c.l.b16 %v836
    %v858 = vunpack.c.l.b16 %v837
    %v859 = vunpack.c.l.b16 %v838
    %v860 = vunpack.c.l.b16 %v839
    %v861 = vunpack.c.l.b16 %v840
    %v862 = vunpack.c.l.b16 %v841
    %v863 = vunpack.c.l.b16 %v842
    %v864 = vunpack.c.l.b16 %v843
    %v865 = vunpack.c.l.b16 %v844
    %v866 = vpack.c.b16 %v857, %v856
    %v867 = vpack.c.b16 %v859, %v858
    %v868 = vpack.c.b16 %v861, %v860
    %v869 = vpack.c.b16 %v863, %v862
    %v870 = vpack.c.b16 %v865, %v864
    %vm876 = vcmask 654336
    %v878 = vsel %vm876, %v834, 0
    %880 = vmatprep.subr.bf16.mxu0 0
    %881 = vmatpush1.bf16.msra.mxu0 %v866
    %882 = vmatprep.subr.bf16.mxu0 0
    %883 = vmatpush1.bf16.msra.mxu0 %v867
    %884 = vmatprep.subr.bf16.mxu0 0
    %885 = vmatpush1.bf16.msra.mxu0 %v868
    %886 = vmatprep.subr.bf16.mxu0 0
    %887 = vmatpush1.bf16.msra.mxu0 %v869
    %888 = vmatprep.subr.bf16.mxu0 0
    %889 = vmatpush1.bf16.msra.mxu0 %v870
    %890 = vmatprep.subr.bf16.mxu0 0
    %891 = vmatpush1.bf16.msra.mxu0 0
    %892 = vmatprep.subr.bf16.mxu0 0
    %893 = vmatpush1.bf16.msra.mxu0 0
    %894 = vmatprep.subr.bf16.mxu0 0
    %895 = vmatpush1.bf16.msra.mxu0 0
    %896 = vmatprep.subr.bf16.mxu0 0
    %897 = vmatpush1.bf16.msra.mxu0 0
    %898 = vmatprep.subr.bf16.mxu0 0
    %899 = vmatpush1.bf16.msra.mxu0 0
    %900 = vmatprep.subr.bf16.mxu0 0
    %901 = vmatpush1.bf16.msra.mxu0 0
    %902 = vmatprep.subr.bf16.mxu0 0
    %903 = vmatpush1.bf16.msra.mxu0 0
    %904 = vmatprep.subr.bf16.mxu0 0
    %905 = vmatpush1.bf16.msra.mxu0 0
    %906 = vmatprep.subr.bf16.mxu0 0
    %907 = vmatpush1.bf16.msra.mxu0 0
    %908 = vmatprep.subr.bf16.mxu0 0
    %909 = vmatpush1.bf16.msra.mxu0 0
    %910 = vmatprep.subr.bf16.mxu0 0
    %911 = vmatpush1.bf16.msra.mxu0 0
    %912 = vmatprep.mubr.bf16.mxu0 0
    %913 = vmatmul.mubr.bf16.gmra.mrb[0].mxu0 %v878
    %v914 = vpop.f32.mrb[0].mxu0
    %v915 = vadd.f32 %v845, %v914
    %v916 = vpop.f32.mrb[0].mxu0
    %v917 = vpop.f32.mrb[0].mxu0
    %v918 = vpop.f32.mrb[0].mxu0
    %919 = vdwg.mxu0
    %vm920 = vcmp.gt.f32.partialorder %v915, 0.0
    %v921 = vmin.f32 %v915, 0.0
    %v922 = vmul.f32 %v921, 1.442695
    %v923 = vpow.pop %v922
    %v924 = vsub.f32 %v923, 1.0
    %v925 = vsel %vm920, %v915, %v924
    %v926 = vpack.c.bf16 %v925, %v925
    %v927 = vld [vmem:[#allocation2 + $0x130] sm:$0xf]
    %v928 = vld [vmem:[#allocation2 + $0x134] sm:$0xf]
    %v929 = vld [vmem:[#allocation2 + $0x138] sm:$0xf]
    %v930 = vld [vmem:[#allocation2 + $0x13c] sm:$0x7]
    %v931 = vld [vmem:[#allocation7 + $0x6] ss:$0 sm:$0xff]
    %v936 = vunpack.c.l.b16 %v927
    %v937 = vunpack.c.l.b16 %v928
    %v938 = vunpack.c.l.b16 %v929
    %v939 = vunpack.c.l.b16 %v930
    %v940 = vpack.c.b16 %v937, %v936
    %v941 = vpack.c.b16 %v939, %v938
    %v944 = vsel %vm567, %v926, 0
    %vm946 = vcmask 1046528
    %v948 = vsel %vm946, %v941, 0
    %950 = vmatprep.subr.bf16.mxu0 0
    %951 = vmatpush1.bf16.msra.mxu0 %v940
    %952 = vmatprep.subr.bf16.mxu0 0
    %953 = vmatpush1.bf16.msra.mxu0 %v948
    %954 = vmatprep.subr.bf16.mxu0 0
    %955 = vmatpush1.bf16.msra.mxu0 0
    %956 = vmatprep.subr.bf16.mxu0 0
    %957 = vmatpush1.bf16.msra.mxu0 0
    %958 = vmatprep.subr.bf16.mxu0 0
    %959 = vmatpush1.bf16.msra.mxu0 0
    %960 = vmatprep.subr.bf16.mxu0 0
    %961 = vmatpush1.bf16.msra.mxu0 0
    %962 = vmatprep.subr.bf16.mxu0 0
    %963 = vmatpush1.bf16.msra.mxu0 0
    %964 = vmatprep.subr.bf16.mxu0 0
    %965 = vmatpush1.bf16.msra.mxu0 0
    %966 = vmatprep.subr.bf16.mxu0 0
    %967 = vmatpush1.bf16.msra.mxu0 0
    %968 = vmatprep.subr.bf16.mxu0 0
    %969 = vmatpush1.bf16.msra.mxu0 0
    %970 = vmatprep.subr.bf16.mxu0 0
    %971 = vmatpush1.bf16.msra.mxu0 0
    %972 = vmatprep.subr.bf16.mxu0 0
    %973 = vmatpush1.bf16.msra.mxu0 0
    %974 = vmatprep.subr.bf16.mxu0 0
    %975 = vmatpush1.bf16.msra.mxu0 0
    %976 = vmatprep.subr.bf16.mxu0 0
    %977 = vmatpush1.bf16.msra.mxu0 0
    %978 = vmatprep.subr.bf16.mxu0 0
    %979 = vmatpush1.bf16.msra.mxu0 0
    %980 = vmatprep.subr.bf16.mxu0 0
    %981 = vmatpush1.bf16.msra.mxu0 0
    %982 = vmatprep.mubr.bf16.mxu0 0
    %983 = vmatmul.mubr.bf16.gmra.mrb[0].mxu0 %v944
    %v984 = vpop.f32.mrb[0].mxu0
    %v985 = vadd.f32 %v931, %v984
    %v986 = vpop.f32.mrb[0].mxu0
    %v987 = vpop.f32.mrb[0].mxu0
    %v988 = vpop.f32.mrb[0].mxu0
    %989 = vdwg.mxu0
    %vm990 = vcmp.gt.f32.partialorder %v985, 0.0
    %v991 = vmin.f32 %v985, 0.0
    %v992 = vmul.f32 %v991, 1.442695
    %v993 = vpow.pop %v992
    %v994 = vsub.f32 %v993, 1.0
    %v995 = vsel %vm990, %v985, %v994
    %997 = vrot.lane.b32.xlu0 %v323, 48
    %v998 = vpop.permute.xlu0 %997
    %1001 = vrot.lane.b32.xlu0 %v995, 52
    %v1002 = vpop.permute.xlu0 %1001
    %vm1004 = vcmask 392192
    %v1005 = vsel %vm1004, %v76, %v998
    %v1006 = vsel %vm577, %v1005, %v1002
    %v1007 = vpack.c.bf16 %v1006, %v1006
    %v1008 = vld [vmem:[#allocation4] sm:$0xff]
    %v1009 = vld [vmem:[#allocation4 + $0x8] sm:$0xff]
    %v1010 = vld [vmem:[#allocation4 + $0x10] sm:$0xff]
    %v1011 = vld [vmem:[#allocation4 + $0x18] sm:$0xff]
    %v1012 = vld [vmem:[#allocation4 + $0x20] sm:$0xff]
    %v1013 = vld [vmem:[#allocation4 + $0x28] sm:$0xff]
    %v1014 = vld [vmem:[#allocation4 + $0x30] sm:$0xff]
    %v1015 = vld [vmem:[#allocation4 + $0x38] sm:$0xff]
    %v1016 = vld [vmem:[#allocation4 + $0x40] sm:$0xff]
    %v1017 = vld [vmem:[#allocation4 + $0x48] sm:$0xff]
    %v1018 = vld [vmem:[#allocation4 + $0x50] sm:$0xff]
    %v1019 = vld [vmem:[#allocation4 + $0x58] sm:$0xff]
    %v1020 = vld [vmem:[#allocation4 + $0x60] sm:$0xff]
    %v1021 = vld [vmem:[#allocation4 + $0x68] sm:$0xff]
    %v1022 = vld [vmem:[#allocation4 + $0x70] sm:$0xff]
    %v1023 = vld [vmem:[#allocation4 + $0x78] sm:$0xff]
    %v1024 = vld [vmem:[#allocation4 + $0x80] sm:$0xff]
    %v1025 = vld [vmem:[#allocation4 + $0x88] sm:$0xff]
    %s1026 = scalar_lea.vmem [#allocation7], 7
    %v1027 = vld [vmem:[%s1026] ss:$8 sm:$0xf]
    %v1029 = vlaneseq
    %v1030 = vshrl.u32 %v1029, 7
    %v1031 = vsub.s32 0, %v1030
    %v1032 = vrot.slane %v1027, %v1031
    %v1033 = vlaneseq
    %v1034 = vshrl.u32 %v1033, 7
    %v1035 = vsub.s32 1, %v1034
    %v1036 = vrot.slane %v1027, %v1035
    %v1037 = vlaneseq
    %v1038 = vshrl.u32 %v1037, 7
    %v1039 = vsub.s32 2, %v1038
    %v1040 = vrot.slane %v1027, %v1039
    %v1041 = vlaneseq
    %v1042 = vshrl.u32 %v1041, 7
    %v1043 = vsub.s32 3, %v1042
    %v1044 = vrot.slane %v1027, %v1043
    %v1067 = vunpack.c.l.b16 %v1008
    %v1068 = vunpack.c.h.b16 %v1008
    %v1069 = vunpack.c.l.b16 %v1009
    %v1070 = vunpack.c.h.b16 %v1009
    %v1071 = vunpack.c.l.b16 %v1010
    %v1072 = vunpack.c.h.b16 %v1010
    %v1073 = vunpack.c.l.b16 %v1011
    %v1074 = vunpack.c.h.b16 %v1011
    %v1075 = vunpack.c.l.b16 %v1012
    %v1076 = vunpack.c.h.b16 %v1012
    %v1077 = vunpack.c.l.b16 %v1013
    %v1078 = vunpack.c.h.b16 %v1013
    %v1079 = vunpack.c.l.b16 %v1014
    %v1080 = vunpack.c.h.b16 %v1014
    %v1081 = vunpack.c.l.b16 %v1015
    %v1082 = vunpack.c.h.b16 %v1015
    %v1083 = vunpack.c.l.b16 %v1016
    %v1084 = vunpack.c.h.b16 %v1016
    %v1085 = vunpack.c.l.b16 %v1017
    %v1086 = vunpack.c.h.b16 %v1017
    %v1087 = vunpack.c.l.b16 %v1018
    %v1088 = vunpack.c.h.b16 %v1018
    %v1089 = vunpack.c.l.b16 %v1019
    %v1090 = vunpack.c.h.b16 %v1019
    %v1091 = vunpack.c.l.b16 %v1020
    %v1092 = vunpack.c.h.b16 %v1020
    %v1093 = vunpack.c.l.b16 %v1021
    %v1094 = vunpack.c.h.b16 %v1021
    %v1095 = vunpack.c.l.b16 %v1022
    %v1096 = vunpack.c.h.b16 %v1022
    %v1097 = vunpack.c.l.b16 %v1023
    %v1098 = vunpack.c.h.b16 %v1023
    %v1099 = vunpack.c.l.b16 %v1024
    %v1100 = vunpack.c.h.b16 %v1024
    %v1101 = vunpack.c.l.b16 %v1025
    %v1102 = vunpack.c.h.b16 %v1025
    %v1103 = vpack.c.b16 %v1071, %v1067
    %v1104 = vpack.c.b16 %v1072, %v1068
    %v1105 = vpack.c.b16 %v1073, %v1069
    %v1106 = vpack.c.b16 %v1074, %v1070
    %v1107 = vpack.c.b16 %v1079, %v1075
    %v1108 = vpack.c.b16 %v1080, %v1076
    %v1109 = vpack.c.b16 %v1081, %v1077
    %v1110 = vpack.c.b16 %v1082, %v1078
    %v1111 = vpack.c.b16 %v1087, %v1083
    %v1112 = vpack.c.b16 %v1088, %v1084
    %v1113 = vpack.c.b16 %v1089, %v1085
    %v1114 = vpack.c.b16 %v1090, %v1086
    %v1115 = vpack.c.b16 %v1095, %v1091
    %v1116 = vpack.c.b16 %v1096, %v1092
    %v1117 = vpack.c.b16 %v1097, %v1093
    %v1118 = vpack.c.b16 %v1098, %v1094
    %v1119 = vpack.c.b16 %v1099, %v1099
    %v1120 = vpack.c.b16 %v1100, %v1100
    %v1121 = vpack.c.b16 %v1101, %v1101
    %v1122 = vpack.c.b16 %v1102, %v1102
    %vm1139 = vcmask 588800
    %v1141 = vsel %vm1139, %v1007, 0
    %vm1143 = vcmask 1043456
    %v1145 = vsel %vm1143, %v1119, 0
    %v1148 = vsel %vm1143, %v1120, 0
    %v1151 = vsel %vm1143, %v1121, 0
    %v1154 = vsel %vm1143, %v1122, 0
    %1156 = vmatprep.subr.bf16.mxu0 %v1104
    %1157 = vmatpush1.bf16.msra.mxu0 %v1103
    %1158 = vmatprep.subr.bf16.mxu0 %v1108
    %1159 = vmatpush1.bf16.msra.mxu0 %v1107
    %1160 = vmatprep.subr.bf16.mxu0 %v1112
    %1161 = vmatpush1.bf16.msra.mxu0 %v1111
    %1162 = vmatprep.subr.bf16.mxu0 %v1116
    %1163 = vmatpush1.bf16.msra.mxu0 %v1115
    %1164 = vmatprep.subr.bf16.mxu0 %v1148
    %1165 = vmatpush1.bf16.msra.mxu0 %v1145
    %1166 = vmatprep.subr.bf16.mxu0 0
    %1167 = vmatpush1.bf16.msra.mxu0 0
    %1168 = vmatprep.subr.bf16.mxu0 0
    %1169 = vmatpush1.bf16.msra.mxu0 0
    %1170 = vmatprep.subr.bf16.mxu0 0
    %1171 = vmatpush1.bf16.msra.mxu0 0
    %1172 = vmatprep.subr.bf16.mxu0 0
    %1173 = vmatpush1.bf16.msra.mxu0 0
    %1174 = vmatprep.subr.bf16.mxu0 0
    %1175 = vmatpush1.bf16.msra.mxu0 0
    %1176 = vmatprep.subr.bf16.mxu0 0
    %1177 = vmatpush1.bf16.msra.mxu0 0
    %1178 = vmatprep.subr.bf16.mxu0 0
    %1179 = vmatpush1.bf16.msra.mxu0 0
    %1180 = vmatprep.subr.bf16.mxu0 0
    %1181 = vmatpush1.bf16.msra.mxu0 0
    %1182 = vmatprep.subr.bf16.mxu0 0
    %1183 = vmatpush1.bf16.msra.mxu0 0
    %1184 = vmatprep.subr.bf16.mxu0 0
    %1185 = vmatpush1.bf16.msra.mxu0 0
    %1186 = vmatprep.subr.bf16.mxu0 0
    %1187 = vmatpush1.bf16.msra.mxu0 0
    %1188 = vmatprep.mubr.bf16.mxu0 0
    %1189 = vmatmul.mubr.bf16.gmra.mrb[0].mxu0 %v1141
    %v1190 = vpop.f32.mrb[0].mxu0
    %v1191 = vadd.f32 %v1032, %v1190
    %v1192 = vpop.f32.mrb[0].mxu0
    %v1193 = vadd.f32 %v1036, %v1192
    %v1194 = vpop.f32.mrb[0].mxu0
    %v1195 = vpop.f32.mrb[0].mxu0
    %1196 = vdwg.mxu0
    %1197 = vmatprep.subr.bf16.mxu0 %v1106
    %1198 = vmatpush1.bf16.msra.mxu0 %v1105
    %1199 = vmatprep.subr.bf16.mxu0 %v1110
    %1200 = vmatpush1.bf16.msra.mxu0 %v1109
    %1201 = vmatprep.subr.bf16.mxu0 %v1114
    %1202 = vmatpush1.bf16.msra.mxu0 %v1113
    %1203 = vmatprep.subr.bf16.mxu0 %v1118
    %1204 = vmatpush1.bf16.msra.mxu0 %v1117
    %1205 = vmatprep.subr.bf16.mxu0 %v1154
    %1206 = vmatpush1.bf16.msra.mxu0 %v1151
    %1207 = vmatprep.subr.bf16.mxu0 0
    %1208 = vmatpush1.bf16.msra.mxu0 0
    %1209 = vmatprep.subr.bf16.mxu0 0
    %1210 = vmatpush1.bf16.msra.mxu0 0
    %1211 = vmatprep.subr.bf16.mxu0 0
    %1212 = vmatpush1.bf16.msra.mxu0 0
    %1213 = vmatprep.subr.bf16.mxu0 0
    %1214 = vmatpush1.bf16.msra.mxu0 0
    %1215 = vmatprep.subr.bf16.mxu0 0
    %1216 = vmatpush1.bf16.msra.mxu0 0
    %1217 = vmatprep.subr.bf16.mxu0 0
    %1218 = vmatpush1.bf16.msra.mxu0 0
    %1219 = vmatprep.subr.bf16.mxu0 0
    %1220 = vmatpush1.bf16.msra.mxu0 0
    %1221 = vmatprep.subr.bf16.mxu0 0
    %1222 = vmatpush1.bf16.msra.mxu0 0
    %1223 = vmatprep.subr.bf16.mxu0 0
    %1224 = vmatpush1.bf16.msra.mxu0 0
    %1225 = vmatprep.subr.bf16.mxu0 0
    %1226 = vmatpush1.bf16.msra.mxu0 0
    %1227 = vmatprep.subr.bf16.mxu0 0
    %1228 = vmatpush1.bf16.msra.mxu0 0
    %1229 = vmatprep.mubr.bf16.mxu0 0
    %1230 = vmatmul.mubr.bf16.gmra.mrb[0].mxu0 %v1141
    %v1231 = vpop.f32.mrb[0].mxu0
    %v1232 = vadd.f32 %v1040, %v1231
    %v1233 = vpop.f32.mrb[0].mxu0
    %v1234 = vadd.f32 %v1044, %v1233
    %v1235 = vpop.f32.mrb[0].mxu0
    %v1236 = vpop.f32.mrb[0].mxu0
    %1237 = vdwg.mxu0
    %vm1238 = vcmp.gt.f32.partialorder %v1191, 0.0
    %vm1239 = vcmp.gt.f32.partialorder %v1193, 0.0
    %vm1240 = vcmp.gt.f32.partialorder %v1232, 0.0
    %vm1241 = vcmp.gt.f32.partialorder %v1234, 0.0
    %v1242 = vmin.f32 %v1191, 0.0
    %v1243 = vmin.f32 %v1193, 0.0
    %v1244 = vmin.f32 %v1232, 0.0
    %v1245 = vmin.f32 %v1234, 0.0
    %v1246 = vmul.f32 %v1242, 1.442695
    %v1247 = vpow.pop %v1246
    %v1248 = vmul.f32 %v1243, 1.442695
    %v1249 = vpow.pop %v1248
    %v1250 = vmul.f32 %v1244, 1.442695
    %v1251 = vpow.pop %v1250
    %v1252 = vmul.f32 %v1245, 1.442695
    %v1253 = vpow.pop %v1252
    %v1254 = vsub.f32 %v1247, 1.0
    %v1255 = vsub.f32 %v1249, 1.0
    %v1256 = vsub.f32 %v1251, 1.0
    %v1257 = vsub.f32 %v1253, 1.0
    %v1258 = vsel %vm1238, %v1191, %v1254
    %v1259 = vsel %vm1239, %v1193, %v1255
    %v1260 = vsel %vm1240, %v1232, %v1256
    %v1261 = vsel %vm1241, %v1234, %v1257
    %v1262 = vpack.c.bf16 %v1258, %v1258
    %v1263 = vpack.c.bf16 %v1259, %v1259
    %v1264 = vpack.c.bf16 %v1260, %v1260
    %v1265 = vpack.c.bf16 %v1261, %v1261
    %v1266 = vld [vmem:[#allocation6] sm:$0xff]
    %v1267 = vld [vmem:[#allocation6 + $0x8] sm:$0xff]
    %v1268 = vld [vmem:[#allocation6 + $0x10] sm:$0xff]
    %v1269 = vld [vmem:[#allocation6 + $0x18] sm:$0xff]
    %v1270 = vld [vmem:[#allocation6 + $0x20] sm:$0xff]
    %v1271 = vld [vmem:[#allocation6 + $0x28] sm:$0xff]
    %v1272 = vld [vmem:[#allocation6 + $0x30] sm:$0xff]
    %v1273 = vld [vmem:[#allocation6 + $0x38] sm:$0xff]
    %v1274 = vld [vmem:[#allocation6 + $0x40] sm:$0xff]
    %v1275 = vld [vmem:[#allocation6 + $0x48] sm:$0xff]
    %v1276 = vld [vmem:[#allocation6 + $0x50] sm:$0xff]
    %v1277 = vld [vmem:[#allocation6 + $0x58] sm:$0xff]
    %v1278 = vld [vmem:[#allocation6 + $0x60] sm:$0xff]
    %v1279 = vld [vmem:[#allocation6 + $0x68] sm:$0xff]
    %v1280 = vld [vmem:[#allocation6 + $0x70] sm:$0xff]
    %v1281 = vld [vmem:[#allocation6 + $0x78] sm:$0xff]
    %v1282 = vld [vmem:[#allocation6 + $0x80] sm:$0xff]
    %v1283 = vld [vmem:[#allocation6 + $0x88] sm:$0xff]
    %v1284 = vld [vmem:[#allocation6 + $0x90] sm:$0xff]
    %v1285 = vld [vmem:[#allocation6 + $0x98] sm:$0xff]
    %v1286 = vld [vmem:[#allocation6 + $0xa0] sm:$0xff]
    %v1287 = vld [vmem:[#allocation6 + $0xa8] sm:$0xff]
    %v1288 = vld [vmem:[#allocation6 + $0xb0] sm:$0xff]
    %v1289 = vld [vmem:[#allocation6 + $0xb8] sm:$0xff]
    %v1290 = vld [vmem:[#allocation6 + $0xc0] sm:$0xff]
    %v1291 = vld [vmem:[#allocation6 + $0xc8] sm:$0xff]
    %v1292 = vld [vmem:[#allocation6 + $0xd0] sm:$0xff]
    %v1293 = vld [vmem:[#allocation6 + $0xd8] sm:$0xff]
    %v1294 = vld [vmem:[#allocation6 + $0xe0] sm:$0xff]
    %v1295 = vld [vmem:[#allocation6 + $0xe8] sm:$0xff]
    %v1296 = vld [vmem:[#allocation6 + $0xf0] sm:$0xff]
    %v1297 = vld [vmem:[#allocation6 + $0xf8] sm:$0xff]
    %v1298 = vld [vmem:[#allocation6 + $0x100] sm:$0xff]
    %v1299 = vld [vmem:[#allocation6 + $0x108] sm:$0xff]
    %v1300 = vld [vmem:[#allocation6 + $0x110] sm:$0xff]
    %v1301 = vld [vmem:[#allocation6 + $0x118] sm:$0xff]
    %v1302 = vld [vmem:[#allocation6 + $0x120] sm:$0xff]
    %v1303 = vld [vmem:[#allocation6 + $0x128] sm:$0xff]
    %v1304 = vld [vmem:[#allocation6 + $0x130] sm:$0xff]
    %v1305 = vld [vmem:[#allocation6 + $0x138] sm:$0xff]
    %v1306 = vld [vmem:[#allocation6 + $0x140] sm:$0xff]
    %v1307 = vld [vmem:[#allocation6 + $0x148] sm:$0xff]
    %v1308 = vld [vmem:[#allocation6 + $0x150] sm:$0xff]
    %v1309 = vld [vmem:[#allocation6 + $0x158] sm:$0xff]
    %v1310 = vld [vmem:[#allocation6 + $0x160] sm:$0xff]
    %v1311 = vld [vmem:[#allocation6 + $0x168] sm:$0xff]
    %v1312 = vld [vmem:[#allocation6 + $0x170] sm:$0xff]
    %v1313 = vld [vmem:[#allocation6 + $0x178] sm:$0xff]
    %v1314 = vld [vmem:[#allocation6 + $0x180] sm:$0xff]
    %v1315 = vld [vmem:[#allocation6 + $0x188] sm:$0xff]
    %v1316 = vld [vmem:[#allocation6 + $0x190] sm:$0xff]
    %v1317 = vld [vmem:[#allocation6 + $0x198] sm:$0xff]
    %v1318 = vld [vmem:[#allocation6 + $0x1a0] sm:$0xff]
    %v1319 = vld [vmem:[#allocation6 + $0x1a8] sm:$0xff]
    %v1320 = vld [vmem:[#allocation6 + $0x1b0] sm:$0xff]
    %v1321 = vld [vmem:[#allocation6 + $0x1b8] sm:$0xff]
    %v1322 = vld [vmem:[#allocation6 + $0x1c0] sm:$0xff]
    %v1323 = vld [vmem:[#allocation6 + $0x1c8] sm:$0xff]
    %v1324 = vld [vmem:[#allocation6 + $0x1d0] sm:$0xff]
    %v1325 = vld [vmem:[#allocation6 + $0x1d8] sm:$0xff]
    %v1326 = vld [vmem:[#allocation6 + $0x1e0] sm:$0xff]
    %v1327 = vld [vmem:[#allocation6 + $0x1e8] sm:$0xff]
    %v1328 = vld [vmem:[#allocation6 + $0x1f0] sm:$0xff]
    %v1329 = vld [vmem:[#allocation6 + $0x1f8] sm:$0xff]
    %s1330 = scalar_lea.vmem [#allocation7], 32
    %v1331 = vld [vmem:[%s1330] ss:$8 sm:$0x3]
    %v1333 = vlaneseq
    %v1334 = vshrl.u32 %v1333, 7
    %v1335 = vsub.s32 0, %v1334
    %v1336 = vrot.slane %v1331, %v1335
    %v1337 = vlaneseq
    %v1338 = vshrl.u32 %v1337, 7
    %v1339 = vsub.s32 1, %v1338
    %v1340 = vrot.slane %v1331, %v1339
    %v1407 = vunpack.c.l.b16 %v1266
    %v1408 = vunpack.c.h.b16 %v1266
    %v1409 = vunpack.c.l.b16 %v1267
    %v1410 = vunpack.c.h.b16 %v1267
    %v1411 = vunpack.c.l.b16 %v1268
    %v1412 = vunpack.c.h.b16 %v1268
    %v1413 = vunpack.c.l.b16 %v1269
    %v1414 = vunpack.c.h.b16 %v1269
    %v1415 = vunpack.c.l.b16 %v1270
    %v1416 = vunpack.c.h.b16 %v1270
    %v1417 = vunpack.c.l.b16 %v1271
    %v1418 = vunpack.c.h.b16 %v1271
    %v1419 = vunpack.c.l.b16 %v1272
    %v1420 = vunpack.c.h.b16 %v1272
    %v1421 = vunpack.c.l.b16 %v1273
    %v1422 = vunpack.c.h.b16 %v1273
    %v1423 = vunpack.c.l.b16 %v1274
    %v1424 = vunpack.c.h.b16 %v1274
    %v1425 = vunpack.c.l.b16 %v1275
    %v1426 = vunpack.c.h.b16 %v1275
    %v1427 = vunpack.c.l.b16 %v1276
    %v1428 = vunpack.c.h.b16 %v1276
    %v1429 = vunpack.c.l.b16 %v1277
    %v1430 = vunpack.c.h.b16 %v1277
    %v1431 = vunpack.c.l.b16 %v1278
    %v1432 = vunpack.c.h.b16 %v1278
    %v1433 = vunpack.c.l.b16 %v1279
    %v1434 = vunpack.c.h.b16 %v1279
    %v1435 = vunpack.c.l.b16 %v1280
    %v1436 = vunpack.c.h.b16 %v1280
    %v1437 = vunpack.c.l.b16 %v1281
    %v1438 = vunpack.c.h.b16 %v1281
    %v1439 = vunpack.c.l.b16 %v1282
    %v1440 = vunpack.c.h.b16 %v1282
    %v1441 = vunpack.c.l.b16 %v1283
    %v1442 = vunpack.c.h.b16 %v1283
    %v1443 = vunpack.c.l.b16 %v1284
    %v1444 = vunpack.c.h.b16 %v1284
    %v1445 = vunpack.c.l.b16 %v1285
    %v1446 = vunpack.c.h.b16 %v1285
    %v1447 = vunpack.c.l.b16 %v1286
    %v1448 = vunpack.c.h.b16 %v1286
    %v1449 = vunpack.c.l.b16 %v1287
    %v1450 = vunpack.c.h.b16 %v1287
    %v1451 = vunpack.c.l.b16 %v1288
    %v1452 = vunpack.c.h.b16 %v1288
    %v1453 = vunpack.c.l.b16 %v1289
    %v1454 = vunpack.c.h.b16 %v1289
    %v1455 = vunpack.c.l.b16 %v1290
    %v1456 = vunpack.c.h.b16 %v1290
    %v1457 = vunpack.c.l.b16 %v1291
    %v1458 = vunpack.c.h.b16 %v1291
    %v1459 = vunpack.c.l.b16 %v1292
    %v1460 = vunpack.c.h.b16 %v1292
    %v1461 = vunpack.c.l.b16 %v1293
    %v1462 = vunpack.c.h.b16 %v1293
    %v1463 = vunpack.c.l.b16 %v1294
    %v1464 = vunpack.c.h.b16 %v1294
    %v1465 = vunpack.c.l.b16 %v1295
    %v1466 = vunpack.c.h.b16 %v1295
    %v1467 = vunpack.c.l.b16 %v1296
    %v1468 = vunpack.c.h.b16 %v1296
    %v1469 = vunpack.c.l.b16 %v1297
    %v1470 = vunpack.c.h.b16 %v1297
    %v1471 = vunpack.c.l.b16 %v1298
    %v1472 = vunpack.c.h.b16 %v1298
    %v1473 = vunpack.c.l.b16 %v1299
    %v1474 = vunpack.c.h.b16 %v1299
    %v1475 = vunpack.c.l.b16 %v1300
    %v1476 = vunpack.c.h.b16 %v1300
    %v1477 = vunpack.c.l.b16 %v1301
    %v1478 = vunpack.c.h.b16 %v1301
    %v1479 = vunpack.c.l.b16 %v1302
    %v1480 = vunpack.c.h.b16 %v1302
    %v1481 = vunpack.c.l.b16 %v1303
    %v1482 = vunpack.c.h.b16 %v1303
    %v1483 = vunpack.c.l.b16 %v1304
    %v1484 = vunpack.c.h.b16 %v1304
    %v1485 = vunpack.c.l.b16 %v1305
    %v1486 = vunpack.c.h.b16 %v1305
    %v1487 = vunpack.c.l.b16 %v1306
    %v1488 = vunpack.c.h.b16 %v1306
    %v1489 = vunpack.c.l.b16 %v1307
    %v1490 = vunpack.c.h.b16 %v1307
    %v1491 = vunpack.c.l.b16 %v1308
    %v1492 = vunpack.c.h.b16 %v1308
    %v1493 = vunpack.c.l.b16 %v1309
    %v1494 = vunpack.c.h.b16 %v1309
    %v1495 = vunpack.c.l.b16 %v1310
    %v1496 = vunpack.c.h.b16 %v1310
    %v1497 = vunpack.c.l.b16 %v1311
    %v1498 = vunpack.c.h.b16 %v1311
    %v1499 = vunpack.c.l.b16 %v1312
    %v1500 = vunpack.c.h.b16 %v1312
    %v1501 = vunpack.c.l.b16 %v1313
    %v1502 = vunpack.c.h.b16 %v1313
    %v1503 = vunpack.c.l.b16 %v1314
    %v1504 = vunpack.c.h.b16 %v1314
    %v1505 = vunpack.c.l.b16 %v1315
    %v1506 = vunpack.c.h.b16 %v1315
    %v1507 = vunpack.c.l.b16 %v1316
    %v1508 = vunpack.c.h.b16 %v1316
    %v1509 = vunpack.c.l.b16 %v1317
    %v1510 = vunpack.c.h.b16 %v1317
    %v1511 = vunpack.c.l.b16 %v1318
    %v1512 = vunpack.c.h.b16 %v1318
    %v1513 = vunpack.c.l.b16 %v1319
    %v1514 = vunpack.c.h.b16 %v1319
    %v1515 = vunpack.c.l.b16 %v1320
    %v1516 = vunpack.c.h.b16 %v1320
    %v1517 = vunpack.c.l.b16 %v1321
    %v1518 = vunpack.c.h.b16 %v1321
    %v1519 = vunpack.c.l.b16 %v1322
    %v1520 = vunpack.c.h.b16 %v1322
    %v1521 = vunpack.c.l.b16 %v1323
    %v1522 = vunpack.c.h.b16 %v1323
    %v1523 = vunpack.c.l.b16 %v1324
    %v1524 = vunpack.c.h.b16 %v1324
    %v1525 = vunpack.c.l.b16 %v1325
    %v1526 = vunpack.c.h.b16 %v1325
    %v1527 = vunpack.c.l.b16 %v1326
    %v1528 = vunpack.c.h.b16 %v1326
    %v1529 = vunpack.c.l.b16 %v1327
    %v1530 = vunpack.c.h.b16 %v1327
    %v1531 = vunpack.c.l.b16 %v1328
    %v1532 = vunpack.c.h.b16 %v1328
    %v1533 = vunpack.c.l.b16 %v1329
    %v1534 = vunpack.c.h.b16 %v1329
    %v1535 = vpack.c.b16 %v1409, %v1407
    %v1536 = vpack.c.b16 %v1410, %v1408
    %v1537 = vpack.c.b16 %v1413, %v1411
    %v1538 = vpack.c.b16 %v1414, %v1412
    %v1539 = vpack.c.b16 %v1417, %v1415
    %v1540 = vpack.c.b16 %v1418, %v1416
    %v1541 = vpack.c.b16 %v1421, %v1419
    %v1542 = vpack.c.b16 %v1422, %v1420
    %v1543 = vpack.c.b16 %v1425, %v1423
    %v1544 = vpack.c.b16 %v1426, %v1424
    %v1545 = vpack.c.b16 %v1429, %v1427
    %v1546 = vpack.c.b16 %v1430, %v1428
    %v1547 = vpack.c.b16 %v1433, %v1431
    %v1548 = vpack.c.b16 %v1434, %v1432
    %v1549 = vpack.c.b16 %v1437, %v1435
    %v1550 = vpack.c.b16 %v1438, %v1436
    %v1551 = vpack.c.b16 %v1441, %v1439
    %v1552 = vpack.c.b16 %v1442, %v1440
    %v1553 = vpack.c.b16 %v1445, %v1443
    %v1554 = vpack.c.b16 %v1446, %v1444
    %v1555 = vpack.c.b16 %v1449, %v1447
    %v1556 = vpack.c.b16 %v1450, %v1448
    %v1557 = vpack.c.b16 %v1453, %v1451
    %v1558 = vpack.c.b16 %v1454, %v1452
    %v1559 = vpack.c.b16 %v1457, %v1455
    %v1560 = vpack.c.b16 %v1458, %v1456
    %v1561 = vpack.c.b16 %v1461, %v1459
    %v1562 = vpack.c.b16 %v1462, %v1460
    %v1563 = vpack.c.b16 %v1465, %v1463
    %v1564 = vpack.c.b16 %v1466, %v1464
    %v1565 = vpack.c.b16 %v1469, %v1467
    %v1566 = vpack.c.b16 %v1470, %v1468
    %v1567 = vpack.c.b16 %v1473, %v1471
    %v1568 = vpack.c.b16 %v1474, %v1472
    %v1569 = vpack.c.b16 %v1477, %v1475
    %v1570 = vpack.c.b16 %v1478, %v1476
    %v1571 = vpack.c.b16 %v1481, %v1479
    %v1572 = vpack.c.b16 %v1482, %v1480
    %v1573 = vpack.c.b16 %v1485, %v1483
    %v1574 = vpack.c.b16 %v1486, %v1484
    %v1575 = vpack.c.b16 %v1489, %v1487
    %v1576 = vpack.c.b16 %v1490, %v1488
    %v1577 = vpack.c.b16 %v1493, %v1491
    %v1578 = vpack.c.b16 %v1494, %v1492
    %v1579 = vpack.c.b16 %v1497, %v1495
    %v1580 = vpack.c.b16 %v1498, %v1496
    %v1581 = vpack.c.b16 %v1501, %v1499
    %v1582 = vpack.c.b16 %v1502, %v1500
    %v1583 = vpack.c.b16 %v1505, %v1503
    %v1584 = vpack.c.b16 %v1506, %v1504
    %v1585 = vpack.c.b16 %v1509, %v1507
    %v1586 = vpack.c.b16 %v1510, %v1508
    %v1587 = vpack.c.b16 %v1513, %v1511
    %v1588 = vpack.c.b16 %v1514, %v1512
    %v1589 = vpack.c.b16 %v1517, %v1515
    %v1590 = vpack.c.b16 %v1518, %v1516
    %v1591 = vpack.c.b16 %v1521, %v1519
    %v1592 = vpack.c.b16 %v1522, %v1520
    %v1593 = vpack.c.b16 %v1525, %v1523
    %v1594 = vpack.c.b16 %v1526, %v1524
    %v1595 = vpack.c.b16 %v1529, %v1527
    %v1596 = vpack.c.b16 %v1530, %v1528
    %v1597 = vpack.c.b16 %v1533, %v1531
    %v1598 = vpack.c.b16 %v1534, %v1532
    %1663 = vmatprep.subr.bf16.mxu0 %v1536
    %1664 = vmatpush1.bf16.msra.mxu0 %v1535
    %1665 = vmatprep.subr.bf16.mxu0 %v1538
    %1666 = vmatpush1.bf16.msra.mxu0 %v1537
    %1667 = vmatprep.subr.bf16.mxu0 %v1540
    %1668 = vmatpush1.bf16.msra.mxu0 %v1539
    %1669 = vmatprep.subr.bf16.mxu0 %v1542
    %1670 = vmatpush1.bf16.msra.mxu0 %v1541
    %1671 = vmatprep.subr.bf16.mxu0 %v1544
    %1672 = vmatpush1.bf16.msra.mxu0 %v1543
    %1673 = vmatprep.subr.bf16.mxu0 %v1546
    %1674 = vmatpush1.bf16.msra.mxu0 %v1545
    %1675 = vmatprep.subr.bf16.mxu0 %v1548
    %1676 = vmatpush1.bf16.msra.mxu0 %v1547
    %1677 = vmatprep.subr.bf16.mxu0 %v1550
    %1678 = vmatpush1.bf16.msra.mxu0 %v1549
    %1679 = vmatprep.subr.bf16.mxu0 %v1552
    %1680 = vmatpush1.bf16.msra.mxu0 %v1551
    %1681 = vmatprep.subr.bf16.mxu0 %v1554
    %1682 = vmatpush1.bf16.msra.mxu0 %v1553
    %1683 = vmatprep.subr.bf16.mxu0 %v1556
    %1684 = vmatpush1.bf16.msra.mxu0 %v1555
    %1685 = vmatprep.subr.bf16.mxu0 %v1558
    %1686 = vmatpush1.bf16.msra.mxu0 %v1557
    %1687 = vmatprep.subr.bf16.mxu0 %v1560
    %1688 = vmatpush1.bf16.msra.mxu0 %v1559
    %1689 = vmatprep.subr.bf16.mxu0 %v1562
    %1690 = vmatpush1.bf16.msra.mxu0 %v1561
    %1691 = vmatprep.subr.bf16.mxu0 %v1564
    %1692 = vmatpush1.bf16.msra.mxu0 %v1563
    %1693 = vmatprep.subr.bf16.mxu0 %v1566
    %1694 = vmatpush1.bf16.msra.mxu0 %v1565
    %1695 = vmatprep.mubr.bf16.mxu0 %v1263
    %1696 = vmatmul.mubr.bf16.gmra.mrb[0].mxu0 %v1262
    %v1697 = vpop.f32.mrb[0].mxu0
    %v1698 = vadd.f32 %v1336, %v1697
    %v1699 = vpop.f32.mrb[0].mxu0
    %v1700 = vadd.f32 %v1340, %v1699
    %v1701 = vpop.f32.mrb[0].mxu0
    %v1702 = vpop.f32.mrb[0].mxu0
    %1703 = vdwg.mxu0
    %1704 = vmatprep.subr.bf16.mxu0 %v1568
    %1705 = vmatpush1.bf16.msra.mxu0 %v1567
    %1706 = vmatprep.subr.bf16.mxu0 %v1570
    %1707 = vmatpush1.bf16.msra.mxu0 %v1569
    %1708 = vmatprep.subr.bf16.mxu0 %v1572
    %1709 = vmatpush1.bf16.msra.mxu0 %v1571
    %1710 = vmatprep.subr.bf16.mxu0 %v1574
    %1711 = vmatpush1.bf16.msra.mxu0 %v1573
    %1712 = vmatprep.subr.bf16.mxu0 %v1576
    %1713 = vmatpush1.bf16.msra.mxu0 %v1575
    %1714 = vmatprep.subr.bf16.mxu0 %v1578
    %1715 = vmatpush1.bf16.msra.mxu0 %v1577
    %1716 = vmatprep.subr.bf16.mxu0 %v1580
    %1717 = vmatpush1.bf16.msra.mxu0 %v1579
    %1718 = vmatprep.subr.bf16.mxu0 %v1582
    %1719 = vmatpush1.bf16.msra.mxu0 %v1581
    %1720 = vmatprep.subr.bf16.mxu0 %v1584
    %1721 = vmatpush1.bf16.msra.mxu0 %v1583
    %1722 = vmatprep.subr.bf16.mxu0 %v1586
    %1723 = vmatpush1.bf16.msra.mxu0 %v1585
    %1724 = vmatprep.subr.bf16.mxu0 %v1588
    %1725 = vmatpush1.bf16.msra.mxu0 %v1587
    %1726 = vmatprep.subr.bf16.mxu0 %v1590
    %1727 = vmatpush1.bf16.msra.mxu0 %v1589
    %1728 = vmatprep.subr.bf16.mxu0 %v1592
    %1729 = vmatpush1.bf16.msra.mxu0 %v1591
    %1730 = vmatprep.subr.bf16.mxu0 %v1594
    %1731 = vmatpush1.bf16.msra.mxu0 %v1593
    %1732 = vmatprep.subr.bf16.mxu0 %v1596
    %1733 = vmatpush1.bf16.msra.mxu0 %v1595
    %1734 = vmatprep.subr.bf16.mxu0 %v1598
    %1735 = vmatpush1.bf16.msra.mxu0 %v1597
    %1736 = vmatprep.mubr.bf16.mxu0 %v1265
    %1737 = vmatmul.mubr.bf16.gmra.mrb[0].mxu0 %v1264
    %v1738 = vpop.f32.mrb[0].mxu0
    %v1739 = vadd.f32 %v1698, %v1738
    %v1740 = vpop.f32.mrb[0].mxu0
    %v1741 = vadd.f32 %v1700, %v1740
    %v1742 = vpop.f32.mrb[0].mxu0
    %v1743 = vpop.f32.mrb[0].mxu0
    %1744 = vdwg.mxu0
    %vm1745 = vcmp.gt.f32.partialorder %v1739, 0.0
    %vm1746 = vcmp.gt.f32.partialorder %v1741, 0.0
    %v1747 = vmin.f32 %v1739, 0.0
    %v1748 = vmin.f32 %v1741, 0.0
    %v1749 = vmul.f32 %v1747, 1.442695
    %v1750 = vpow.pop %v1749
    %v1751 = vmul.f32 %v1748, 1.442695
    %v1752 = vpow.pop %v1751
    %v1753 = vsub.f32 %v1750, 1.0
    %v1754 = vsub.f32 %v1752, 1.0
    %v1755 = vsel %vm1745, %v1739, %v1753
    %v1756 = vsel %vm1746, %v1741, %v1754
    %v1757 = vpack.c.bf16 %v1755, %v1755
    %v1758 = vpack.c.bf16 %v1756, %v1756
    %v1759 = vld [vmem:[#allocation2 + $0x180] sm:$0xf]
    %v1760 = vld [vmem:[#allocation2 + $0x184] sm:$0xf]
    %v1761 = vld [vmem:[#allocation2 + $0x188] sm:$0xf]
    %v1762 = vld [vmem:[#allocation2 + $0x18c] sm:$0xf]
    %v1763 = vld [vmem:[#allocation2 + $0x190] sm:$0xf]
    %v1764 = vld [vmem:[#allocation2 + $0x194] sm:$0xf]
    %v1765 = vld [vmem:[#allocation2 + $0x198] sm:$0xf]
    %v1766 = vld [vmem:[#allocation2 + $0x19c] sm:$0xf]
    %v1767 = vld [vmem:[#allocation2 + $0x1a0] sm:$0xf]
    %v1768 = vld [vmem:[#allocation2 + $0x1a4] sm:$0xf]
    %v1769 = vld [vmem:[#allocation2 + $0x1a8] sm:$0xf]
    %v1770 = vld [vmem:[#allocation2 + $0x1ac] sm:$0xf]
    %v1771 = vld [vmem:[#allocation2 + $0x1b0] sm:$0xf]
    %v1772 = vld [vmem:[#allocation2 + $0x1b4] sm:$0xf]
    %v1773 = vld [vmem:[#allocation2 + $0x1b8] sm:$0xf]
    %v1774 = vld [vmem:[#allocation2 + $0x1bc] sm:$0xf]
    %v1775 = vld [vmem:[#allocation2 + $0x1c0] sm:$0xf]
    %v1776 = vld [vmem:[#allocation2 + $0x1c4] sm:$0xf]
    %v1777 = vld [vmem:[#allocation2 + $0x1c8] sm:$0xf]
    %v1778 = vld [vmem:[#allocation2 + $0x1cc] sm:$0xf]
    %v1779 = vld [vmem:[#allocation2 + $0x1d0] sm:$0xf]
    %v1780 = vld [vmem:[#allocation2 + $0x1d4] sm:$0xf]
    %v1781 = vld [vmem:[#allocation2 + $0x1d8] sm:$0xf]
    %v1782 = vld [vmem:[#allocation2 + $0x1dc] sm:$0xf]
    %v1783 = vld [vmem:[#allocation2 + $0x1e0] sm:$0xf]
    %v1784 = vld [vmem:[#allocation2 + $0x1e4] sm:$0xf]
    %v1785 = vld [vmem:[#allocation2 + $0x1e8] sm:$0xf]
    %v1786 = vld [vmem:[#allocation2 + $0x1ec] sm:$0xf]
    %v1787 = vld [vmem:[#allocation2 + $0x1f0] sm:$0xf]
    %v1788 = vld [vmem:[#allocation2 + $0x1f4] sm:$0xf]
    %v1789 = vld [vmem:[#allocation2 + $0x1f8] sm:$0xf]
    %v1790 = vld [vmem:[#allocation2 + $0x1fc] sm:$0xf]
    %v1791 = vld [vmem:[#allocation7 + $0x21] ss:$0 sm:$0xff]
    %v1824 = vunpack.c.l.b16 %v1759
    %v1825 = vunpack.c.l.b16 %v1760
    %v1826 = vunpack.c.l.b16 %v1761
    %v1827 = vunpack.c.l.b16 %v1762
    %v1828 = vunpack.c.l.b16 %v1763
    %v1829 = vunpack.c.l.b16 %v1764
    %v1830 = vunpack.c.l.b16 %v1765
    %v1831 = vunpack.c.l.b16 %v1766
    %v1832 = vunpack.c.l.b16 %v1767
    %v1833 = vunpack.c.l.b16 %v1768
    %v1834 = vunpack.c.l.b16 %v1769
    %v1835 = vunpack.c.l.b16 %v1770
    %v1836 = vunpack.c.l.b16 %v1771
    %v1837 = vunpack.c.l.b16 %v1772
    %v1838 = vunpack.c.l.b16 %v1773
    %v1839 = vunpack.c.l.b16 %v1774
    %v1840 = vunpack.c.l.b16 %v1775
    %v1841 = vunpack.c.l.b16 %v1776
    %v1842 = vunpack.c.l.b16 %v1777
    %v1843 = vunpack.c.l.b16 %v1778
    %v1844 = vunpack.c.l.b16 %v1779
    %v1845 = vunpack.c.l.b16 %v1780
    %v1846 = vunpack.c.l.b16 %v1781
    %v1847 = vunpack.c.l.b16 %v1782
    %v1848 = vunpack.c.l.b16 %v1783
    %v1849 = vunpack.c.l.b16 %v1784
    %v1850 = vunpack.c.l.b16 %v1785
    %v1851 = vunpack.c.l.b16 %v1786
    %v1852 = vunpack.c.l.b16 %v1787
    %v1853 = vunpack.c.l.b16 %v1788
    %v1854 = vunpack.c.l.b16 %v1789
    %v1855 = vunpack.c.l.b16 %v1790
    %v1856 = vpack.c.b16 %v1825, %v1824
    %v1857 = vpack.c.b16 %v1827, %v1826
    %v1858 = vpack.c.b16 %v1829, %v1828
    %v1859 = vpack.c.b16 %v1831, %v1830
    %v1860 = vpack.c.b16 %v1833, %v1832
    %v1861 = vpack.c.b16 %v1835, %v1834
    %v1862 = vpack.c.b16 %v1837, %v1836
    %v1863 = vpack.c.b16 %v1839, %v1838
    %v1864 = vpack.c.b16 %v1841, %v1840
    %v1865 = vpack.c.b16 %v1843, %v1842
    %v1866 = vpack.c.b16 %v1845, %v1844
    %v1867 = vpack.c.b16 %v1847, %v1846
    %v1868 = vpack.c.b16 %v1849, %v1848
    %v1869 = vpack.c.b16 %v1851, %v1850
    %v1870 = vpack.c.b16 %v1853, %v1852
    %v1871 = vpack.c.b16 %v1855, %v1854
    %1888 = vmatprep.subr.bf16.mxu0 0
    %1889 = vmatpush1.bf16.msra.mxu0 %v1856
    %1890 = vmatprep.subr.bf16.mxu0 0
    %1891 = vmatpush1.bf16.msra.mxu0 %v1857
    %1892 = vmatprep.subr.bf16.mxu0 0
    %1893 = vmatpush1.bf16.msra.mxu0 %v1858
    %1894 = vmatprep.subr.bf16.mxu0 0
    %1895 = vmatpush1.bf16.msra.mxu0 %v1859
    %1896 = vmatprep.subr.bf16.mxu0 0
    %1897 = vmatpush1.bf16.msra.mxu0 %v1860
    %1898 = vmatprep.subr.bf16.mxu0 0
    %1899 = vmatpush1.bf16.msra.mxu0 %v1861
    %1900 = vmatprep.subr.bf16.mxu0 0
    %1901 = vmatpush1.bf16.msra.mxu0 %v1862
    %1902 = vmatprep.subr.bf16.mxu0 0
    %1903 = vmatpush1.bf16.msra.mxu0 %v1863
    %1904 = vmatprep.subr.bf16.mxu0 0
    %1905 = vmatpush1.bf16.msra.mxu0 %v1864
    %1906 = vmatprep.subr.bf16.mxu0 0
    %1907 = vmatpush1.bf16.msra.mxu0 %v1865
    %1908 = vmatprep.subr.bf16.mxu0 0
    %1909 = vmatpush1.bf16.msra.mxu0 %v1866
    %1910 = vmatprep.subr.bf16.mxu0 0
    %1911 = vmatpush1.bf16.msra.mxu0 %v1867
    %1912 = vmatprep.subr.bf16.mxu0 0
    %1913 = vmatpush1.bf16.msra.mxu0 %v1868
    %1914 = vmatprep.subr.bf16.mxu0 0
    %1915 = vmatpush1.bf16.msra.mxu0 %v1869
    %1916 = vmatprep.subr.bf16.mxu0 0
    %1917 = vmatpush1.bf16.msra.mxu0 %v1870
    %1918 = vmatprep.subr.bf16.mxu0 0
    %1919 = vmatpush1.bf16.msra.mxu0 %v1871
    %1920 = vmatprep.mubr.bf16.mxu0 %v1758
    %1921 = vmatmul.mubr.bf16.gmra.mrb[0].mxu0 %v1757
    %v1922 = vpop.f32.mrb[0].mxu0
    %v1923 = vadd.f32 %v1791, %v1922
    %v1924 = vpop.f32.mrb[0].mxu0
    %v1925 = vpop.f32.mrb[0].mxu0
    %v1926 = vpop.f32.mrb[0].mxu0
    %1927 = vdwg.mxu0
    %vm1928 = vcmp.gt.f32.partialorder %v1923, 0.0
    %v1929 = vmin.f32 %v1923, 0.0
    %v1930 = vmul.f32 %v1929, 1.442695
    %v1931 = vpow.pop %v1930
    %v1932 = vsub.f32 %v1931, 1.0
    %v1933 = vsel %vm1928, %v1923, %v1932
    %v1934 = vpack.c.bf16 %v1933, %v1933
    %v1935 = vld [vmem:[#allocation2 + $0x140] sm:$0xf]
    %v1936 = vld [vmem:[#allocation2 + $0x144] sm:$0xf]
    %v1937 = vld [vmem:[#allocation2 + $0x148] sm:$0xf]
    %v1938 = vld [vmem:[#allocation2 + $0x14c] sm:$0xf]
    %v1939 = vld [vmem:[#allocation2 + $0x150] sm:$0xf]
    %v1940 = vld [vmem:[#allocation2 + $0x154] sm:$0xf]
    %v1941 = vld [vmem:[#allocation2 + $0x158] sm:$0xf]
    %v1942 = vld [vmem:[#allocation2 + $0x15c] sm:$0xf]
    %v1943 = vld [vmem:[#allocation2 + $0x160] sm:$0xf]
    %v1944 = vld [vmem:[#allocation2 + $0x164] sm:$0xf]
    %v1945 = vld [vmem:[#allocation2 + $0x168] sm:$0xf]
    %v1946 = vld [vmem:[#allocation2 + $0x16c] sm:$0xf]
    %v1947 = vld [vmem:[#allocation2 + $0x170] sm:$0xf]
    %v1948 = vld [vmem:[#allocation2 + $0x174] sm:$0xf]
    %v1949 = vld [vmem:[#allocation2 + $0x178] sm:$0xf]
    %v1950 = vld [vmem:[#allocation2 + $0x17c] sm:$0xf]
    %v1951 = vld [vmem:[#allocation7 + $0x22] ss:$0 sm:$0xff]
    %v1968 = vunpack.c.l.b16 %v1935
    %v1969 = vunpack.c.l.b16 %v1936
    %v1970 = vunpack.c.l.b16 %v1937
    %v1971 = vunpack.c.l.b16 %v1938
    %v1972 = vunpack.c.l.b16 %v1939
    %v1973 = vunpack.c.l.b16 %v1940
    %v1974 = vunpack.c.l.b16 %v1941
    %v1975 = vunpack.c.l.b16 %v1942
    %v1976 = vunpack.c.l.b16 %v1943
    %v1977 = vunpack.c.l.b16 %v1944
    %v1978 = vunpack.c.l.b16 %v1945
    %v1979 = vunpack.c.l.b16 %v1946
    %v1980 = vunpack.c.l.b16 %v1947
    %v1981 = vunpack.c.l.b16 %v1948
    %v1982 = vunpack.c.l.b16 %v1949
    %v1983 = vunpack.c.l.b16 %v1950
    %v1984 = vpack.c.b16 %v1969, %v1968
    %v1985 = vpack.c.b16 %v1971, %v1970
    %v1986 = vpack.c.b16 %v1973, %v1972
    %v1987 = vpack.c.b16 %v1975, %v1974
    %v1988 = vpack.c.b16 %v1977, %v1976
    %v1989 = vpack.c.b16 %v1979, %v1978
    %v1990 = vpack.c.b16 %v1981, %v1980
    %v1991 = vpack.c.b16 %v1983, %v1982
    %2000 = vmatprep.subr.bf16.mxu0 0
    %2001 = vmatpush1.bf16.msra.mxu0 %v1984
    %2002 = vmatprep.subr.bf16.mxu0 0
    %2003 = vmatpush1.bf16.msra.mxu0 %v1985
    %2004 = vmatprep.subr.bf16.mxu0 0
    %2005 = vmatpush1.bf16.msra.mxu0 %v1986
    %2006 = vmatprep.subr.bf16.mxu0 0
    %2007 = vmatpush1.bf16.msra.mxu0 %v1987
    %2008 = vmatprep.subr.bf16.mxu0 0
    %2009 = vmatpush1.bf16.msra.mxu0 %v1988
    %2010 = vmatprep.subr.bf16.mxu0 0
    %2011 = vmatpush1.bf16.msra.mxu0 %v1989
    %2012 = vmatprep.subr.bf16.mxu0 0
    %2013 = vmatpush1.bf16.msra.mxu0 %v1990
    %2014 = vmatprep.subr.bf16.mxu0 0
    %2015 = vmatpush1.bf16.msra.mxu0 %v1991
    %2016 = vmatprep.subr.bf16.mxu0 0
    %2017 = vmatpush1.bf16.msra.mxu0 0
    %2018 = vmatprep.subr.bf16.mxu0 0
    %2019 = vmatpush1.bf16.msra.mxu0 0
    %2020 = vmatprep.subr.bf16.mxu0 0
    %2021 = vmatpush1.bf16.msra.mxu0 0
    %2022 = vmatprep.subr.bf16.mxu0 0
    %2023 = vmatpush1.bf16.msra.mxu0 0
    %2024 = vmatprep.subr.bf16.mxu0 0
    %2025 = vmatpush1.bf16.msra.mxu0 0
    %2026 = vmatprep.subr.bf16.mxu0 0
    %2027 = vmatpush1.bf16.msra.mxu0 0
    %2028 = vmatprep.subr.bf16.mxu0 0
    %2029 = vmatpush1.bf16.msra.mxu0 0
    %2030 = vmatprep.subr.bf16.mxu0 0
    %2031 = vmatpush1.bf16.msra.mxu0 0
    %2032 = vmatprep.mubr.bf16.mxu0 0
    %2033 = vmatmul.mubr.bf16.gmra.mrb[0].mxu0 %v1934
    %v2034 = vpop.f32.mrb[0].mxu0
    %v2035 = vadd.f32 %v1951, %v2034
    %v2036 = vpop.f32.mrb[0].mxu0
    %v2037 = vpop.f32.mrb[0].mxu0
    %v2038 = vpop.f32.mrb[0].mxu0
    %2039 = vdwg.mxu0
    %2040 = vst [vmem:[%s5] sm:$0xff] %v2035
    // Predicated region
    $region38: #{hardware_vision_forward.1} parent=1 // pred_check
      _
    $region39: #{hardware_vision_forward.1} parent=1 // pred_check_branch
      %2042 = sbr.rel (0) target = $region41
    $region40: #{hardware_vision_forward.1} parent=1 // pred_region
      _
    $region41: #{hardware_vision_forward.1} parent=1 // pred_fallthru
      _
    // Predicated region
    $region42: #{hardware_vision_forward.1} parent=1 // pred_check
      _
    $region43: #{hardware_vision_forward.1} parent=1 // pred_check_branch
      %2044 = sbr.rel (0) target = $region45
    $region44: #{hardware_vision_forward.1} parent=1 // pred_region
      _
    $region45: #{hardware_vision_forward.1} parent=1 // pred_fallthru
      _
    %2045 = vsyncpa [#allocation3], 1
    %2046 = vsyncpa [#allocation5], 1
    %2047 = vsyncpa [#allocation8], 1

</llo_original>
